<compile_context>
chip_gen: v5e
topology: v5e:2x2
jax: 0.10.0
libtpu: 0.0.40
codegen_flags: <defaults>
</compile_context>

<pallas_src>
import functools
import math

import jax
import jax.numpy as jnp
import numpy as np
from jax.experimental import pallas as pl
from jax.experimental.pallas import tpu as pltpu

LN_EPS = 1e-5
BN_EPS = 1e-5
PROJ_HIDDEN = 256
PROJ_OUT = 128
NUM_LAYERS = 2


# ---------------------------------------------------------------------------
# In-kernel helpers
# ---------------------------------------------------------------------------

def _layer_norm(x, w, b, eps=LN_EPS):
    mu = jnp.mean(x, axis=-1, keepdims=True)
    var = jnp.mean((x - mu) ** 2, axis=-1, keepdims=True)
    return (x - mu) * jax.lax.rsqrt(var + eps) * w + b


# ---------------------------------------------------------------------------
# Fused kernel: one grid step == one branch (time / freq)
# ---------------------------------------------------------------------------

def tft_branch_kernel(x_ref,        # [B*L, C]   pre-permuted input rows (b-major)
                      wqkv_ref,     # [NL, C, 3C]  (1/sqrt(C) folded into the Q slice)
                      wo_ref,       # [NL, C, C]
                      w1_ref,       # [NL, C, 2C]
                      w2_ref,       # [NL, 2C, C]
                      vec_ref,      # [NL, 8, 3C]  rows: bqkv|bo|b1|b2|ln1w|ln1b|ln2w|ln2b
                      pw1_ref,      # [D, 256]     (BN scale folded)
                      pw2_ref,      # [256, 128]
                      hvec_ref,     # [3, 256]     rows: pb1(folded) | pb2(pad) | bs(pad)
                      ws_ref,       # [D, Kmax]
                      h_ref,        # out [B*L, C]
                      xw_ref,       # out [NL, B*L, C]
                      s_ref,        # out [B, Kmax]
                      z_ref):       # out [B, 128]
    BL, C = x_ref.shape
    NL = wqkv_ref.shape[0]
    B, Kmax = s_ref.shape
    L = BL // B
    Z = z_ref.shape[1]

    x0 = x_ref[...]                 # permuted original input; used for attn @ x_in
    h2d = x0

    for li in range(NL):
        vec = vec_ref[li]                                  # [8, 3C]
        bqkv = vec[0:1, :]
        bo = vec[1:2, 0:C]
        b1 = vec[2:3, 0:2 * C]
        b2 = vec[3:4, 0:C]
        ln1w = vec[4:5, 0:C]
        ln1b = vec[5:6, 0:C]
        ln2w = vec[6:7, 0:C]
        ln2b = vec[7:8, 0:C]

        # Fused Q|K|V projection over all B*L rows (one MXU push).
        qkv = jnp.dot(h2d, wqkv_ref[li],
                      preferred_element_type=jnp.float32) + bqkv        # [B*L, 3C]

        ctx_blocks, xw_blocks = [], []
        for b in range(B):                                 # tiny [L, L] blocks, unrolled
            blk = qkv[b * L:(b + 1) * L, :]
            q = blk[:, 0:C]
            k = blk[:, C:2 * C]
            v = blk[:, 2 * C:3 * C]
            # q @ k^T (scale already folded into Wq / bq).
            sc = jax.lax.dot_general(q, k, (((1,), (1,)), ((), ())),
                                     preferred_element_type=jnp.float32)  # [L, L]
            sc = sc - jnp.max(sc, axis=-1, keepdims=True)
            p = jnp.exp(sc)
            attn = p / jnp.sum(p, axis=-1, keepdims=True)  # exact softmax
            # Single push for both context (attn @ v) and visualisation (attn @ x_in).
            vx = jnp.concatenate([v, x0[b * L:(b + 1) * L, :]], axis=1)   # [L, 2C]
            cw = jnp.dot(attn, vx, preferred_element_type=jnp.float32)    # [L, 2C]
            ctx_blocks.append(cw[:, 0:C])
            xw_blocks.append(cw[:, C:2 * C])
        ctx2d = jnp.concatenate(ctx_blocks, axis=0)                       # [B*L, C]
        xw_ref[li] = jnp.concatenate(xw_blocks, axis=0)                   # slab write

        attn_out = jnp.dot(ctx2d, wo_ref[li],
                           preferred_element_type=jnp.float32) + bo
        x1 = _layer_norm(h2d + attn_out, ln1w, ln1b)
        ff = jnp.dot(x1, w1_ref[li], preferred_element_type=jnp.float32) + b1
        ff = jnp.maximum(ff, 0.0)
        ff = jnp.dot(ff, w2_ref[li], preferred_element_type=jnp.float32) + b2
        h2d = _layer_norm(x1 + ff, ln2w, ln2b)

    h_ref[...] = h2d                                                      # slab write

    # Head input HF [B, D]: per-batch row-major flatten of the [L, C] block.
    hf = jnp.concatenate(
        [jnp.concatenate([h2d[b * L + l: b * L + l + 1, :] for l in range(L)], axis=1)
         for b in range(B)], axis=0)                                      # [B, D]

    hvec = hvec_ref[...]
    pb1 = hvec[0:1, :]                 # BN-folded bias of projector Linear 1
    pb2 = hvec[1:2, 0:Z]
    bs = hvec[2:3, 0:Kmax]

    # Heads batched over B (one MXU push each).
    y = jnp.maximum(jnp.dot(hf, pw1_ref[...],
                            preferred_element_type=jnp.float32) + pb1, 0.0)
    z_ref[...] = jnp.dot(y, pw2_ref[...],
                         preferred_element_type=jnp.float32) + pb2
    s_ref[...] = jnp.dot(hf, ws_ref[...],
                         preferred_element_type=jnp.float32) + bs


# ---------------------------------------------------------------------------
# Wrapper: single fused pallas_call, grid=(2,) over branches
# ---------------------------------------------------------------------------

def _bspec(shape):
    """BlockSpec selecting one branch slice; branch dim squeezed in the kernel."""
    nd = len(shape)
    block = (None,) + tuple(shape[1:])

    def imap(br, _nd=nd):
        return (br,) + (0,) * (_nd - 1)

    return pl.BlockSpec(block, imap)


def tft_viz_forward(x_in_t, x_in_f, packed, K_shift, K_shift_f):
    B, C, L = x_in_t.shape
    D = L * C
    NL = packed["wqkv"].shape[1]
    Kmax = packed["ws"].shape[2]
    Z = packed["pw2"].shape[2]

    # permute(0, 2, 1).float() + row-stack, done in the wrapper (fused by XLA).
    x_all = jnp.stack(
        [jnp.transpose(x_in_t.astype(jnp.float32), (0, 2, 1)).reshape(B * L, C),
         jnp.transpose(x_in_f.astype(jnp.float32), (0, 2, 1)).reshape(B * L, C)],
        axis=0)                                                           # [2, B*L, C]

    args = (x_all, packed["wqkv"], packed["wo"], packed["w1"], packed["w2"],
            packed["enc_vec"], packed["pw1"], packed["pw2"], packed["head_vec"],
            packed["ws"])

    out_shape = (
        jax.ShapeDtypeStruct((2, B * L, C), jnp.float32),        # h
        jax.ShapeDtypeStruct((2, NL, B * L, C), jnp.float32),    # attn @ x_in per layer
        jax.ShapeDtypeStruct((2, B, Kmax), jnp.float32),         # shift logits (padded)
        jax.ShapeDtypeStruct((2, B, Z), jnp.float32),            # projector output
    )

    h_all, xw_all, s_all, z_all = pl.pallas_call(
        tft_branch_kernel,
        grid=(2,),
        in_specs=[_bspec(a.shape) for a in args],
        out_specs=tuple(_bspec(o.shape) for o in out_shape),
        out_shape=out_shape,
        compiler_params=pltpu.CompilerParams(
            dimension_semantics=("parallel",),      # v7x: one branch per TensorCore
            vmem_limit_bytes=32 * 1024 * 1024),
    )(*args)

    # Wrapper-side reshapes / slices (cheap XLA ops, fused).
    h_time = h_all[0].reshape(B, D)
    h_freq = h_all[1].reshape(B, D)
    z_time, z_freq = z_all[0], z_all[1]
    s_time = s_all[0, :, :K_shift]
    s_freq = s_all[1, :, :K_shift_f]
    xw_t = [xw_all[0, li].reshape(B, L, C) for li in range(NL)]
    xw_f = [xw_all[1, li].reshape(B, L, C) for li in range(NL)]
    return h_time, z_time, s_time, h_freq, z_freq, s_freq, xw_t, xw_f


# ---------------------------------------------------------------------------
# Parameter initialisation (deterministic, synthetic) and packing
# ---------------------------------------------------------------------------

def init_branch_params(key, C, L, K, num_layers=NUM_LAYERS):
    D = L * C
    ks = jax.random.split(key, 3)
    s = 0.25
    enc_layers = []
    for lk in jax.random.split(ks[0], num_layers):
        kk = jax.random.split(lk, 10)
        enc_layers.append(dict(
            wq=jax.random.normal(kk[0], (C, C), jnp.float32) * s,
            wk=jax.random.normal(kk[1], (C, C), jnp.float32) * s,
            wv=jax.random.normal(kk[2], (C, C), jnp.float32) * s,
            bq=0.02 * jax.random.normal(kk[3], (C,), jnp.float32),
            bk=jnp.zeros((C,), jnp.float32),
            bv=0.02 * jax.random.normal(kk[4], (C,), jnp.float32),
            wo=jax.random.normal(kk[5], (C, C), jnp.float32) * s,
            bo=jnp.zeros((C,), jnp.float32),
            ln1w=jnp.ones((C,), jnp.float32), ln1b=jnp.zeros((C,), jnp.float32),
            w1=jax.random.normal(kk[6], (C, 2 * C), jnp.float32) * s,
            b1=0.02 * jax.random.normal(kk[7], (2 * C,), jnp.float32),
            w2=jax.random.normal(kk[8], (2 * C, C), jnp.float32) * s,
            b2=jnp.zeros((C,), jnp.float32),
            ln2w=jnp.ones((C,), jnp.float32), ln2b=jnp.zeros((C,), jnp.float32)))
    pk = jax.random.split(ks[1], 6)
    proj = dict(
        w1=jax.random.normal(pk[0], (D, PROJ_HIDDEN), jnp.float32) * 0.1,
        b1=0.02 * jax.random.normal(pk[1], (PROJ_HIDDEN,), jnp.float32),
        bn_gamma=1.0 + 0.1 * jax.random.normal(pk[2], (PROJ_HIDDEN,), jnp.float32),
        bn_beta=0.1 * jax.random.normal(pk[3], (PROJ_HIDDEN,), jnp.float32),
        bn_mean=jnp.zeros((PROJ_HIDDEN,), jnp.float32),
        bn_var=jnp.ones((PROJ_HIDDEN,), jnp.float32),
        w2=jax.random.normal(pk[4], (PROJ_HIDDEN, PROJ_OUT), jnp.float32) * 0.1,
        b2=0.02 * jax.random.normal(pk[5], (PROJ_OUT,), jnp.float32))
    sk = jax.random.split(ks[2], 2)
    shift = dict(w=jax.random.normal(sk[0], (D, K), jnp.float32) * 0.1,
                 b=0.02 * jax.random.normal(sk[1], (K,), jnp.float32))
    return dict(encoder=enc_layers, projector=proj, shift=shift)


def pack_tft_params(branch_t, branch_f, C, Kmax):
    """Fold (attention scale, eval-mode BatchNorm), pad shift heads to Kmax,
    pack small vectors into slabs, and stack the two branches on a leading axis."""
    def pack_branch(bp):
        scale = 1.0 / math.sqrt(C)
        width = 3 * C

        def row(v):
            return jnp.pad(v, (0, width - v.shape[0]))[None, :]

        wqkv, wo, w1, w2, vecs = [], [], [], [], []
        for lp in bp["encoder"]:
            wqkv.append(jnp.concatenate([lp["wq"] * scale, lp["wk"], lp["wv"]], axis=1))
            wo.append(lp["wo"]); w1.append(lp["w1"]); w2.append(lp["w2"])
            bqkv = jnp.concatenate([lp["bq"] * scale, lp["bk"], lp["bv"]])
            vecs.append(jnp.concatenate(
                [row(bqkv), row(lp["bo"]), row(lp["b1"]), row(lp["b2"]),
                 row(lp["ln1w"]), row(lp["ln1b"]), row(lp["ln2w"]), row(lp["ln2b"])],
                axis=0))                                                  # [8, 3C]

        pr = bp["projector"]
        bn_s = pr["bn_gamma"] / jnp.sqrt(pr["bn_var"] + BN_EPS)
        pw1 = pr["w1"] * bn_s[None, :]
        pb1 = (pr["b1"] - pr["bn_mean"]) * bn_s + pr["bn_beta"]
        pw2, pb2 = pr["w2"], pr["b2"]

        sw, sb = bp["shift"]["w"], bp["shift"]["b"]
        K = sw.shape[1]
        ws = jnp.pad(sw, ((0, 0), (0, Kmax - K)))
        bs = jnp.pad(sb, (0, Kmax - K))
        H = pw1.shape[1]
        hvec = jnp.stack([pb1,
                          jnp.pad(pb2, (0, H - pb2.shape[0])),
                          jnp.pad(bs, (0, H - Kmax))], axis=0)            # [3, H]
        return dict(wqkv=jnp.stack(wqkv), wo=jnp.stack(wo), w1=jnp.stack(w1),
                    w2=jnp.stack(w2), enc_vec=jnp.stack(vecs),
                    pw1=pw1, pw2=pw2, head_vec=hvec, ws=ws)

    pt, pf = pack_branch(branch_t), pack_branch(branch_f)
    return {k: jnp.stack([pt[k], pf[k]], axis=0) for k in pt}


# ---------------------------------------------------------------------------
# Pure numpy reference (float64) for a correctness check
# ---------------------------------------------------------------------------

def _f64(a):
    return np.asarray(a, dtype=np.float64)


def reference_branch(x_in, bp):
    x = np.transpose(_f64(x_in), (0, 2, 1))                  # [B, L, C]
    B, L, C = x.shape

    def ln(u, w, b):
        mu = u.mean(-1, keepdims=True)
        var = ((u - mu) ** 2).mean(-1, keepdims=True)
        return (u - mu) / np.sqrt(var + LN_EPS) * w + b

    h = x.copy()
    xw_all = []
    for lp in bp["encoder"]:
        q = h @ _f64(lp["wq"]) + _f64(lp["bq"])
        k = h @ _f64(lp["wk"]) + _f64(lp["bk"])
        v = h @ _f64(lp["wv"]) + _f64(lp["bv"])
        sc = np.einsum("blc,bmc->blm", q, k) / math.sqrt(C)
        sc = sc - sc.max(-1, keepdims=True)
        p = np.exp(sc)
        attn = p / p.sum(-1, keepdims=True)
        ctx = np.einsum("blm,bmc->blc", attn, v)
        xw_all.append(np.einsum("blm,bmc->blc", attn, x))
        ao = ctx @ _f64(lp["wo"]) + _f64(lp["bo"])
        x1 = ln(h + ao, _f64(lp["ln1w"]), _f64(lp["ln1b"]))
        ff = np.maximum(x1 @ _f64(lp["w1"]) + _f64(lp["b1"]), 0.0)
        ff = ff @ _f64(lp["w2"]) + _f64(lp["b2"])
        h = ln(x1 + ff, _f64(lp["ln2w"]), _f64(lp["ln2b"]))
    hf = h.reshape(B, L * C)
    pr = bp["projector"]
    bn_s = _f64(pr["bn_gamma"]) / np.sqrt(_f64(pr["bn_var"]) + BN_EPS)
    y = (hf @ _f64(pr["w1"]) + _f64(pr["b1"]) - _f64(pr["bn_mean"])) * bn_s \
        + _f64(pr["bn_beta"])
    z = np.maximum(y, 0.0) @ _f64(pr["w2"]) + _f64(pr["b2"])
    s = hf @ _f64(bp["shift"]["w"]) + _f64(bp["shift"]["b"])
    return hf, z, s, xw_all


# ---------------------------------------------------------------------------
# Main
# ---------------------------------------------------------------------------

if __name__ == "__main__":
    B = 2                 # batch
    C = 4                 # configs.input_channels (d_model)
    L = 8                 # configs.TSlength_aligned (sequence length)
    K_shift = 4           # args.K_shift
    K_shift_f = 3         # args.K_shift_f
    Kmax = max(K_shift, K_shift_f)

    key = jax.random.PRNGKey(0)
    kt, kf, kp = jax.random.split(key, 3)
    x_in_t = jax.random.normal(kt, (B, C, L), dtype=jnp.float32)
    x_in_f = jax.random.normal(kf, (B, C, L), dtype=jnp.float32)

    kpt, kpf = jax.random.split(kp)
    branch_t = init_branch_params(kpt, C, L, K_shift)
    branch_f = init_branch_params(kpf, C, L, K_shift_f)
    packed = pack_tft_params(branch_t, branch_f, C, Kmax)

    fwd = jax.jit(functools.partial(tft_viz_forward,
                                    K_shift=K_shift, K_shift_f=K_shift_f))
    outs = fwd(x_in_t, x_in_f, packed)
    jax.tree_util.tree_map(jax.block_until_ready, outs)

    h_time, z_time, s_time, h_freq, z_freq, s_freq, xw_t, xw_f = outs
    D = L * C
    assert h_time.shape == (B, D) and h_freq.shape == (B, D)
    assert z_time.shape == (B, PROJ_OUT) and z_freq.shape == (B, PROJ_OUT)
    assert s_time.shape == (B, K_shift) and s_freq.shape == (B, K_shift_f)
    assert len(xw_t) == NUM_LAYERS and all(x.shape == (B, L, C) for x in xw_t)
    assert len(xw_f) == NUM_LAYERS and all(x.shape == (B, L, C) for x in xw_f)
    assert all(bool(jnp.all(jnp.isfinite(o))) for o in
               (h_time, z_time, s_time, h_freq, z_freq, s_freq))

    # Numerical check against a pure-numpy float64 reference.
    rh_t, rz_t, rs_t, rxw_t = reference_branch(x_in_t, branch_t)
    rh_f, rz_f, rs_f, rxw_f = reference_branch(x_in_f, branch_f)
    tol = dict(rtol=1e-2, atol=1e-2)
    np.testing.assert_allclose(np.asarray(h_time), rh_t, **tol)
    np.testing.assert_allclose(np.asarray(z_time), rz_t, **tol)
    np.testing.assert_allclose(np.asarray(s_time), rs_t, **tol)
    np.testing.assert_allclose(np.asarray(h_freq), rh_f, **tol)
    np.testing.assert_allclose(np.asarray(z_freq), rz_f, **tol)
    np.testing.assert_allclose(np.asarray(s_freq), rs_f, **tol)
    for got, ref in list(zip(xw_t, rxw_t)) + list(zip(xw_f, rxw_f)):
        np.testing.assert_allclose(np.asarray(got), ref, **tol)

    print("KERNEL_OK")
</pallas_src>

<mosaic_0001>
module attributes {stable_mosaic.version = 11 : i64} {
  func.func @tft_branch_kernel(%arg0: i32, %arg1: memref<1x16x4xf32, #tpu.memory_space<vmem>>, %arg2: memref<1x2x4x12xf32, #tpu.memory_space<vmem>>, %arg3: memref<1x2x4x4xf32, #tpu.memory_space<vmem>>, %arg4: memref<1x2x4x8xf32, #tpu.memory_space<vmem>>, %arg5: memref<1x2x8x4xf32, #tpu.memory_space<vmem>>, %arg6: memref<1x2x8x12xf32, #tpu.memory_space<vmem>>, %arg7: memref<1x32x256xf32, #tpu.memory_space<vmem>>, %arg8: memref<1x256x128xf32, #tpu.memory_space<vmem>>, %arg9: memref<1x3x256xf32, #tpu.memory_space<vmem>>, %arg10: memref<1x32x4xf32, #tpu.memory_space<vmem>>, %arg11: memref<1x16x4xf32, #tpu.memory_space<vmem>>, %arg12: memref<1x2x16x4xf32, #tpu.memory_space<vmem>>, %arg13: memref<1x2x4xf32, #tpu.memory_space<vmem>>, %arg14: memref<1x2x128xf32, #tpu.memory_space<vmem>>) attributes {dimension_semantics = [#tpu.dimension_semantics<parallel>], iteration_bounds = array<i64: 2>, scalar_prefetch = 0 : i64, scratch_operands = 0 : i64, tpu.core_type = #tpu.core_type<tc>, window_params = [{transform_indices = @transform_0, window_bounds = array<i64: 1, 16, 4>}, {transform_indices = @transform_1, window_bounds = array<i64: 1, 2, 4, 12>}, {transform_indices = @transform_2, window_bounds = array<i64: 1, 2, 4, 4>}, {transform_indices = @transform_3, window_bounds = array<i64: 1, 2, 4, 8>}, {transform_indices = @transform_4, window_bounds = array<i64: 1, 2, 8, 4>}, {transform_indices = @transform_5, window_bounds = array<i64: 1, 2, 8, 12>}, {transform_indices = @transform_6, window_bounds = array<i64: 1, 32, 256>}, {transform_indices = @transform_7, window_bounds = array<i64: 1, 256, 128>}, {transform_indices = @transform_8, window_bounds = array<i64: 1, 3, 256>}, {transform_indices = @transform_9, window_bounds = array<i64: 1, 32, 4>}, {transform_indices = @transform_10, window_bounds = array<i64: 1, 16, 4>}, {transform_indices = @transform_11, window_bounds = array<i64: 1, 2, 16, 4>}, {transform_indices = @transform_12, window_bounds = array<i64: 1, 2, 4>}, {transform_indices = @transform_13, window_bounds = array<i64: 1, 2, 128>}]} {
    %c0 = arith.constant 0 : index
    %c0_0 = arith.constant 0 : index
    %c0_1 = arith.constant 0 : index
    %0 = vector.load %arg1[%c0, %c0_0, %c0_1] : memref<1x16x4xf32, #tpu.memory_space<vmem>>, vector<1x16x4xf32>
    %1 = vector.shape_cast %0 : vector<1x16x4xf32> to vector<16x4xf32>
    %c0_2 = arith.constant 0 : index
    %c0_3 = arith.constant 0 : index
    %c0_4 = arith.constant 0 : index
    %c0_5 = arith.constant 0 : index
    %2 = vector.load %arg6[%c0_2, %c0_3, %c0_4, %c0_5] : memref<1x2x8x12xf32, #tpu.memory_space<vmem>>, vector<1x1x8x12xf32>
    %3 = vector.shape_cast %2 : vector<1x1x8x12xf32> to vector<8x12xf32>
    %4 = vector.extract_strided_slice %3 {offsets = [0, 0], sizes = [1, 12], strides = [1, 1]} : vector<8x12xf32> to vector<1x12xf32>
    %5 = vector.extract_strided_slice %3 {offsets = [1, 0], sizes = [1, 4], strides = [1, 1]} : vector<8x12xf32> to vector<1x4xf32>
    %6 = vector.extract_strided_slice %3 {offsets = [2, 0], sizes = [1, 8], strides = [1, 1]} : vector<8x12xf32> to vector<1x8xf32>
    %7 = vector.extract_strided_slice %3 {offsets = [3, 0], sizes = [1, 4], strides = [1, 1]} : vector<8x12xf32> to vector<1x4xf32>
    %8 = vector.extract_strided_slice %3 {offsets = [4, 0], sizes = [1, 4], strides = [1, 1]} : vector<8x12xf32> to vector<1x4xf32>
    %9 = vector.extract_strided_slice %3 {offsets = [5, 0], sizes = [1, 4], strides = [1, 1]} : vector<8x12xf32> to vector<1x4xf32>
    %10 = vector.extract_strided_slice %3 {offsets = [6, 0], sizes = [1, 4], strides = [1, 1]} : vector<8x12xf32> to vector<1x4xf32>
    %11 = vector.extract_strided_slice %3 {offsets = [7, 0], sizes = [1, 4], strides = [1, 1]} : vector<8x12xf32> to vector<1x4xf32>
    %c0_6 = arith.constant 0 : index
    %c0_7 = arith.constant 0 : index
    %c0_8 = arith.constant 0 : index
    %c0_9 = arith.constant 0 : index
    %12 = vector.load %arg2[%c0_6, %c0_7, %c0_8, %c0_9] : memref<1x2x4x12xf32, #tpu.memory_space<vmem>>, vector<1x1x4x12xf32>
    %13 = vector.shape_cast %12 : vector<1x1x4x12xf32> to vector<4x12xf32>
    %cst = arith.constant dense<0.000000e+00> : vector<16x12xf32>
    %14 = tpu.matmul %1, %13, %cst {dimension_numbers = #tpu.dot_dimension_numbers<[1], [0], [0], [1], [0, 0, 1, 1], [], []>} : vector<16x4xf32>, vector<4x12xf32>, vector<16x12xf32> -> vector<16x12xf32>
    %15 = vector.broadcast %4 : vector<1x12xf32> to vector<16x12xf32>
    %16 = arith.addf %14, %15 : vector<16x12xf32>
    %17 = vector.extract_strided_slice %16 {offsets = [0, 0], sizes = [8, 12], strides = [1, 1]} : vector<16x12xf32> to vector<8x12xf32>
    %18 = vector.extract_strided_slice %17 {offsets = [0, 0], sizes = [8, 4], strides = [1, 1]} : vector<8x12xf32> to vector<8x4xf32>
    %19 = vector.extract_strided_slice %17 {offsets = [0, 4], sizes = [8, 4], strides = [1, 1]} : vector<8x12xf32> to vector<8x4xf32>
    %20 = vector.extract_strided_slice %17 {offsets = [0, 8], sizes = [8, 4], strides = [1, 1]} : vector<8x12xf32> to vector<8x4xf32>
    %cst_10 = arith.constant dense<0.000000e+00> : vector<8x8xf32>
    %21 = tpu.matmul %18, %19, %cst_10 {dimension_numbers = #tpu.dot_dimension_numbers<[1], [1], [0], [0], [0, 0, 1, 0], [], []>} : vector<8x4xf32>, vector<8x4xf32>, vector<8x8xf32> -> vector<8x8xf32>
    %cst_11 = arith.constant dense<0xFF800000> : vector<8xf32>
    %22 = vector.multi_reduction <maximumf>, %21, %cst_11 [1] : vector<8x8xf32> to vector<8xf32>
    %23 = vector.shape_cast %22 : vector<8xf32> to vector<8x1xf32>
    %24 = vector.broadcast %23 : vector<8x1xf32> to vector<8x8xf32>
    %25 = arith.subf %21, %24 : vector<8x8xf32>
    %26 = math.exp %25 : vector<8x8xf32>
    %cst_12 = arith.constant dense<0.000000e+00> : vector<8xf32>
    %27 = vector.multi_reduction <add>, %26, %cst_12 [1] : vector<8x8xf32> to vector<8xf32>
    %28 = vector.shape_cast %27 : vector<8xf32> to vector<8x1xf32>
    %29 = vector.broadcast %28 : vector<8x1xf32> to vector<8x8xf32>
    %30 = arith.divf %26, %29 : vector<8x8xf32>
    %31 = vector.extract_strided_slice %1 {offsets = [0, 0], sizes = [8, 4], strides = [1, 1]} : vector<16x4xf32> to vector<8x4xf32>
    %32 = tpu.concatenate %20, %31 in 1 : vector<8x4xf32>, vector<8x4xf32> -> vector<8x8xf32>
    %cst_13 = arith.constant dense<0.000000e+00> : vector<8x8xf32>
    %33 = tpu.matmul %30, %32, %cst_13 {dimension_numbers = #tpu.dot_dimension_numbers<[1], [0], [0], [1], [0, 0, 1, 1], [], []>} : vector<8x8xf32>, vector<8x8xf32>, vector<8x8xf32> -> vector<8x8xf32>
    %34 = vector.extract_strided_slice %33 {offsets = [0, 0], sizes = [8, 4], strides = [1, 1]} : vector<8x8xf32> to vector<8x4xf32>
    %35 = vector.extract_strided_slice %33 {offsets = [0, 4], sizes = [8, 4], strides = [1, 1]} : vector<8x8xf32> to vector<8x4xf32>
    %36 = vector.extract_strided_slice %16 {offsets = [8, 0], sizes = [8, 12], strides = [1, 1]} : vector<16x12xf32> to vector<8x12xf32>
    %37 = vector.extract_strided_slice %36 {offsets = [0, 0], sizes = [8, 4], strides = [1, 1]} : vector<8x12xf32> to vector<8x4xf32>
    %38 = vector.extract_strided_slice %36 {offsets = [0, 4], sizes = [8, 4], strides = [1, 1]} : vector<8x12xf32> to vector<8x4xf32>
    %39 = vector.extract_strided_slice %36 {offsets = [0, 8], sizes = [8, 4], strides = [1, 1]} : vector<8x12xf32> to vector<8x4xf32>
    %cst_14 = arith.constant dense<0.000000e+00> : vector<8x8xf32>
    %40 = tpu.matmul %37, %38, %cst_14 {dimension_numbers = #tpu.dot_dimension_numbers<[1], [1], [0], [0], [0, 0, 1, 0], [], []>} : vector<8x4xf32>, vector<8x4xf32>, vector<8x8xf32> -> vector<8x8xf32>
    %cst_15 = arith.constant dense<0xFF800000> : vector<8xf32>
    %41 = vector.multi_reduction <maximumf>, %40, %cst_15 [1] : vector<8x8xf32> to vector<8xf32>
    %42 = vector.shape_cast %41 : vector<8xf32> to vector<8x1xf32>
    %43 = vector.broadcast %42 : vector<8x1xf32> to vector<8x8xf32>
    %44 = arith.subf %40, %43 : vector<8x8xf32>
    %45 = math.exp %44 : vector<8x8xf32>
    %cst_16 = arith.constant dense<0.000000e+00> : vector<8xf32>
    %46 = vector.multi_reduction <add>, %45, %cst_16 [1] : vector<8x8xf32> to vector<8xf32>
    %47 = vector.shape_cast %46 : vector<8xf32> to vector<8x1xf32>
    %48 = vector.broadcast %47 : vector<8x1xf32> to vector<8x8xf32>
    %49 = arith.divf %45, %48 : vector<8x8xf32>
    %50 = vector.extract_strided_slice %1 {offsets = [8, 0], sizes = [8, 4], strides = [1, 1]} : vector<16x4xf32> to vector<8x4xf32>
    %51 = tpu.concatenate %39, %50 in 1 : vector<8x4xf32>, vector<8x4xf32> -> vector<8x8xf32>
    %cst_17 = arith.constant dense<0.000000e+00> : vector<8x8xf32>
    %52 = tpu.matmul %49, %51, %cst_17 {dimension_numbers = #tpu.dot_dimension_numbers<[1], [0], [0], [1], [0, 0, 1, 1], [], []>} : vector<8x8xf32>, vector<8x8xf32>, vector<8x8xf32> -> vector<8x8xf32>
    %53 = vector.extract_strided_slice %52 {offsets = [0, 0], sizes = [8, 4], strides = [1, 1]} : vector<8x8xf32> to vector<8x4xf32>
    %54 = vector.extract_strided_slice %52 {offsets = [0, 4], sizes = [8, 4], strides = [1, 1]} : vector<8x8xf32> to vector<8x4xf32>
    %55 = tpu.concatenate %34, %53 in 0 : vector<8x4xf32>, vector<8x4xf32> -> vector<16x4xf32>
    %56 = tpu.concatenate %35, %54 in 0 : vector<8x4xf32>, vector<8x4xf32> -> vector<16x4xf32>
    %c0_18 = arith.constant 0 : index
    %c0_19 = arith.constant 0 : index
    %c0_20 = arith.constant 0 : index
    %c0_21 = arith.constant 0 : index
    %57 = vector.load %arg12[%c0_18, %c0_19, %c0_20, %c0_21] : memref<1x2x16x4xf32, #tpu.memory_space<vmem>>, vector<1x1x16x4xf32>
    %58 = vector.shape_cast %57 : vector<1x1x16x4xf32> to vector<16x4xf32>
    %59 = vector.shape_cast %56 : vector<16x4xf32> to vector<1x1x16x4xf32>
    tpu.vector_store %arg12[%c0_18, %c0_19, %c0_20, %c0_21], %59 {strides = array<i32>} : memref<1x2x16x4xf32, #tpu.memory_space<vmem>>, vector<1x1x16x4xf32>,
    %c0_22 = arith.constant 0 : index
    %c0_23 = arith.constant 0 : index
    %c0_24 = arith.constant 0 : index
    %c0_25 = arith.constant 0 : index
    %60 = vector.load %arg3[%c0_22, %c0_23, %c0_24, %c0_25] : memref<1x2x4x4xf32, #tpu.memory_space<vmem>>, vector<1x1x4x4xf32>
    %61 = vector.shape_cast %60 : vector<1x1x4x4xf32> to vector<4x4xf32>
    %cst_26 = arith.constant dense<0.000000e+00> : vector<16x4xf32>
    %62 = tpu.matmul %55, %61, %cst_26 {dimension_numbers = #tpu.dot_dimension_numbers<[1], [0], [0], [1], [0, 0, 1, 1], [], []>} : vector<16x4xf32>, vector<4x4xf32>, vector<16x4xf32> -> vector<16x4xf32>
    %63 = vector.broadcast %5 : vector<1x4xf32> to vector<16x4xf32>
    %64 = arith.addf %62, %63 : vector<16x4xf32>
    %65 = arith.addf %1, %64 : vector<16x4xf32>
    %cst_27 = arith.constant dense<0.000000e+00> : vector<16xf32>
    %66 = vector.multi_reduction <add>, %65, %cst_27 [1] : vector<16x4xf32> to vector<16xf32>
    %67 = vector.shape_cast %66 : vector<16xf32> to vector<16x1xf32>
    %cst_28 = arith.constant 4.000000e+00 : f32
    %68 = vector.broadcast %cst_28 : f32 to vector<16x1xf32>
    %69 = arith.divf %67, %68 : vector<16x1xf32>
    %70 = vector.broadcast %69 : vector<16x1xf32> to vector<16x4xf32>
    %71 = arith.subf %65, %70 : vector<16x4xf32>
    %72 = arith.mulf %71, %71 : vector<16x4xf32>
    %cst_29 = arith.constant dense<0.000000e+00> : vector<16xf32>
    %73 = vector.multi_reduction <add>, %72, %cst_29 [1] : vector<16x4xf32> to vector<16xf32>
    %74 = vector.shape_cast %73 : vector<16xf32> to vector<16x1xf32>
    %cst_30 = arith.constant 4.000000e+00 : f32
    %75 = vector.broadcast %cst_30 : f32 to vector<16x1xf32>
    %76 = arith.divf %74, %75 : vector<16x1xf32>
    %77 = vector.broadcast %69 : vector<16x1xf32> to vector<16x4xf32>
    %78 = arith.subf %65, %77 : vector<16x4xf32>
    %cst_31 = arith.constant 9.99999974E-6 : f32
    %79 = vector.broadcast %cst_31 : f32 to vector<16x1xf32>
    %80 = arith.addf %76, %79 : vector<16x1xf32>
    %81 = math.rsqrt %80 : vector<16x1xf32>
    %82 = vector.broadcast %81 : vector<16x1xf32> to vector<16x4xf32>
    %83 = arith.mulf %78, %82 : vector<16x4xf32>
    %84 = vector.broadcast %8 : vector<1x4xf32> to vector<16x4xf32>
    %85 = arith.mulf %83, %84 : vector<16x4xf32>
    %86 = vector.broadcast %9 : vector<1x4xf32> to vector<16x4xf32>
    %87 = arith.addf %85, %86 : vector<16x4xf32>
    %c0_32 = arith.constant 0 : index
    %c0_33 = arith.constant 0 : index
    %c0_34 = arith.constant 0 : index
    %c0_35 = arith.constant 0 : index
    %88 = vector.load %arg4[%c0_32, %c0_33, %c0_34, %c0_35] : memref<1x2x4x8xf32, #tpu.memory_space<vmem>>, vector<1x1x4x8xf32>
    %89 = vector.shape_cast %88 : vector<1x1x4x8xf32> to vector<4x8xf32>
    %cst_36 = arith.constant dense<0.000000e+00> : vector<16x8xf32>
    %90 = tpu.matmul %87, %89, %cst_36 {dimension_numbers = #tpu.dot_dimension_numbers<[1], [0], [0], [1], [0, 0, 1, 1], [], []>} : vector<16x4xf32>, vector<4x8xf32>, vector<16x8xf32> -> vector<16x8xf32>
    %91 = vector.broadcast %6 : vector<1x8xf32> to vector<16x8xf32>
    %92 = arith.addf %90, %91 : vector<16x8xf32>
    %cst_37 = arith.constant 0.000000e+00 : f32
    %93 = vector.broadcast %cst_37 : f32 to vector<16x8xf32>
    %94 = arith.maximumf %92, %93 : vector<16x8xf32>
    %c0_38 = arith.constant 0 : index
    %c0_39 = arith.constant 0 : index
    %c0_40 = arith.constant 0 : index
    %c0_41 = arith.constant 0 : index
    %95 = vector.load %arg5[%c0_38, %c0_39, %c0_40, %c0_41] : memref<1x2x8x4xf32, #tpu.memory_space<vmem>>, vector<1x1x8x4xf32>
    %96 = vector.shape_cast %95 : vector<1x1x8x4xf32> to vector<8x4xf32>
    %cst_42 = arith.constant dense<0.000000e+00> : vector<16x4xf32>
    %97 = tpu.matmul %94, %96, %cst_42 {dimension_numbers = #tpu.dot_dimension_numbers<[1], [0], [0], [1], [0, 0, 1, 1], [], []>} : vector<16x8xf32>, vector<8x4xf32>, vector<16x4xf32> -> vector<16x4xf32>
    %98 = vector.broadcast %7 : vector<1x4xf32> to vector<16x4xf32>
    %99 = arith.addf %97, %98 : vector<16x4xf32>
    %100 = arith.addf %87, %99 : vector<16x4xf32>
    %cst_43 = arith.constant dense<0.000000e+00> : vector<16xf32>
    %101 = vector.multi_reduction <add>, %100, %cst_43 [1] : vector<16x4xf32> to vector<16xf32>
    %102 = vector.shape_cast %101 : vector<16xf32> to vector<16x1xf32>
    %cst_44 = arith.constant 4.000000e+00 : f32
    %103 = vector.broadcast %cst_44 : f32 to vector<16x1xf32>
    %104 = arith.divf %102, %103 : vector<16x1xf32>
    %105 = vector.broadcast %104 : vector<16x1xf32> to vector<16x4xf32>
    %106 = arith.subf %100, %105 : vector<16x4xf32>
    %107 = arith.mulf %106, %106 : vector<16x4xf32>
    %cst_45 = arith.constant dense<0.000000e+00> : vector<16xf32>
    %108 = vector.multi_reduction <add>, %107, %cst_45 [1] : vector<16x4xf32> to vector<16xf32>
    %109 = vector.shape_cast %108 : vector<16xf32> to vector<16x1xf32>
    %cst_46 = arith.constant 4.000000e+00 : f32
    %110 = vector.broadcast %cst_46 : f32 to vector<16x1xf32>
    %111 = arith.divf %109, %110 : vector<16x1xf32>
    %112 = vector.broadcast %104 : vector<16x1xf32> to vector<16x4xf32>
    %113 = arith.subf %100, %112 : vector<16x4xf32>
    %cst_47 = arith.constant 9.99999974E-6 : f32
    %114 = vector.broadcast %cst_47 : f32 to vector<16x1xf32>
    %115 = arith.addf %111, %114 : vector<16x1xf32>
    %116 = math.rsqrt %115 : vector<16x1xf32>
    %117 = vector.broadcast %116 : vector<16x1xf32> to vector<16x4xf32>
    %118 = arith.mulf %113, %117 : vector<16x4xf32>
    %119 = vector.broadcast %10 : vector<1x4xf32> to vector<16x4xf32>
    %120 = arith.mulf %118, %119 : vector<16x4xf32>
    %121 = vector.broadcast %11 : vector<1x4xf32> to vector<16x4xf32>
    %122 = arith.addf %120, %121 : vector<16x4xf32>
    %c0_48 = arith.constant 0 : index
    %c1 = arith.constant 1 : index
    %c0_49 = arith.constant 0 : index
    %c0_50 = arith.constant 0 : index
    %123 = vector.load %arg6[%c0_48, %c1, %c0_49, %c0_50] : memref<1x2x8x12xf32, #tpu.memory_space<vmem>>, vector<1x1x8x12xf32>
    %124 = vector.shape_cast %123 : vector<1x1x8x12xf32> to vector<8x12xf32>
    %125 = vector.extract_strided_slice %124 {offsets = [0, 0], sizes = [1, 12], strides = [1, 1]} : vector<8x12xf32> to vector<1x12xf32>
    %126 = vector.extract_strided_slice %124 {offsets = [1, 0], sizes = [1, 4], strides = [1, 1]} : vector<8x12xf32> to vector<1x4xf32>
    %127 = vector.extract_strided_slice %124 {offsets = [2, 0], sizes = [1, 8], strides = [1, 1]} : vector<8x12xf32> to vector<1x8xf32>
    %128 = vector.extract_strided_slice %124 {offsets = [3, 0], sizes = [1, 4], strides = [1, 1]} : vector<8x12xf32> to vector<1x4xf32>
    %129 = vector.extract_strided_slice %124 {offsets = [4, 0], sizes = [1, 4], strides = [1, 1]} : vector<8x12xf32> to vector<1x4xf32>
    %130 = vector.extract_strided_slice %124 {offsets = [5, 0], sizes = [1, 4], strides = [1, 1]} : vector<8x12xf32> to vector<1x4xf32>
    %131 = vector.extract_strided_slice %124 {offsets = [6, 0], sizes = [1, 4], strides = [1, 1]} : vector<8x12xf32> to vector<1x4xf32>
    %132 = vector.extract_strided_slice %124 {offsets = [7, 0], sizes = [1, 4], strides = [1, 1]} : vector<8x12xf32> to vector<1x4xf32>
    %c0_51 = arith.constant 0 : index
    %c1_52 = arith.constant 1 : index
    %c0_53 = arith.constant 0 : index
    %c0_54 = arith.constant 0 : index
    %133 = vector.load %arg2[%c0_51, %c1_52, %c0_53, %c0_54] : memref<1x2x4x12xf32, #tpu.memory_space<vmem>>, vector<1x1x4x12xf32>
    %134 = vector.shape_cast %133 : vector<1x1x4x12xf32> to vector<4x12xf32>
    %cst_55 = arith.constant dense<0.000000e+00> : vector<16x12xf32>
    %135 = tpu.matmul %122, %134, %cst_55 {dimension_numbers = #tpu.dot_dimension_numbers<[1], [0], [0], [1], [0, 0, 1, 1], [], []>} : vector<16x4xf32>, vector<4x12xf32>, vector<16x12xf32> -> vector<16x12xf32>
    %136 = vector.broadcast %125 : vector<1x12xf32> to vector<16x12xf32>
    %137 = arith.addf %135, %136 : vector<16x12xf32>
    %138 = vector.extract_strided_slice %137 {offsets = [0, 0], sizes = [8, 12], strides = [1, 1]} : vector<16x12xf32> to vector<8x12xf32>
    %139 = vector.extract_strided_slice %138 {offsets = [0, 0], sizes = [8, 4], strides = [1, 1]} : vector<8x12xf32> to vector<8x4xf32>
    %140 = vector.extract_strided_slice %138 {offsets = [0, 4], sizes = [8, 4], strides = [1, 1]} : vector<8x12xf32> to vector<8x4xf32>
    %141 = vector.extract_strided_slice %138 {offsets = [0, 8], sizes = [8, 4], strides = [1, 1]} : vector<8x12xf32> to vector<8x4xf32>
    %cst_56 = arith.constant dense<0.000000e+00> : vector<8x8xf32>
    %142 = tpu.matmul %139, %140, %cst_56 {dimension_numbers = #tpu.dot_dimension_numbers<[1], [1], [0], [0], [0, 0, 1, 0], [], []>} : vector<8x4xf32>, vector<8x4xf32>, vector<8x8xf32> -> vector<8x8xf32>
    %cst_57 = arith.constant dense<0xFF800000> : vector<8xf32>
    %143 = vector.multi_reduction <maximumf>, %142, %cst_57 [1] : vector<8x8xf32> to vector<8xf32>
    %144 = vector.shape_cast %143 : vector<8xf32> to vector<8x1xf32>
    %145 = vector.broadcast %144 : vector<8x1xf32> to vector<8x8xf32>
    %146 = arith.subf %142, %145 : vector<8x8xf32>
    %147 = math.exp %146 : vector<8x8xf32>
    %cst_58 = arith.constant dense<0.000000e+00> : vector<8xf32>
    %148 = vector.multi_reduction <add>, %147, %cst_58 [1] : vector<8x8xf32> to vector<8xf32>
    %149 = vector.shape_cast %148 : vector<8xf32> to vector<8x1xf32>
    %150 = vector.broadcast %149 : vector<8x1xf32> to vector<8x8xf32>
    %151 = arith.divf %147, %150 : vector<8x8xf32>
    %152 = vector.extract_strided_slice %1 {offsets = [0, 0], sizes = [8, 4], strides = [1, 1]} : vector<16x4xf32> to vector<8x4xf32>
    %153 = tpu.concatenate %141, %152 in 1 : vector<8x4xf32>, vector<8x4xf32> -> vector<8x8xf32>
    %cst_59 = arith.constant dense<0.000000e+00> : vector<8x8xf32>
    %154 = tpu.matmul %151, %153, %cst_59 {dimension_numbers = #tpu.dot_dimension_numbers<[1], [0], [0], [1], [0, 0, 1, 1], [], []>} : vector<8x8xf32>, vector<8x8xf32>, vector<8x8xf32> -> vector<8x8xf32>
    %155 = vector.extract_strided_slice %154 {offsets = [0, 0], sizes = [8, 4], strides = [1, 1]} : vector<8x8xf32> to vector<8x4xf32>
    %156 = vector.extract_strided_slice %154 {offsets = [0, 4], sizes = [8, 4], strides = [1, 1]} : vector<8x8xf32> to vector<8x4xf32>
    %157 = vector.extract_strided_slice %137 {offsets = [8, 0], sizes = [8, 12], strides = [1, 1]} : vector<16x12xf32> to vector<8x12xf32>
    %158 = vector.extract_strided_slice %157 {offsets = [0, 0], sizes = [8, 4], strides = [1, 1]} : vector<8x12xf32> to vector<8x4xf32>
    %159 = vector.extract_strided_slice %157 {offsets = [0, 4], sizes = [8, 4], strides = [1, 1]} : vector<8x12xf32> to vector<8x4xf32>
    %160 = vector.extract_strided_slice %157 {offsets = [0, 8], sizes = [8, 4], strides = [1, 1]} : vector<8x12xf32> to vector<8x4xf32>
    %cst_60 = arith.constant dense<0.000000e+00> : vector<8x8xf32>
    %161 = tpu.matmul %158, %159, %cst_60 {dimension_numbers = #tpu.dot_dimension_numbers<[1], [1], [0], [0], [0, 0, 1, 0], [], []>} : vector<8x4xf32>, vector<8x4xf32>, vector<8x8xf32> -> vector<8x8xf32>
    %cst_61 = arith.constant dense<0xFF800000> : vector<8xf32>
    %162 = vector.multi_reduction <maximumf>, %161, %cst_61 [1] : vector<8x8xf32> to vector<8xf32>
    %163 = vector.shape_cast %162 : vector<8xf32> to vector<8x1xf32>
    %164 = vector.broadcast %163 : vector<8x1xf32> to vector<8x8xf32>
    %165 = arith.subf %161, %164 : vector<8x8xf32>
    %166 = math.exp %165 : vector<8x8xf32>
    %cst_62 = arith.constant dense<0.000000e+00> : vector<8xf32>
    %167 = vector.multi_reduction <add>, %166, %cst_62 [1] : vector<8x8xf32> to vector<8xf32>
    %168 = vector.shape_cast %167 : vector<8xf32> to vector<8x1xf32>
    %169 = vector.broadcast %168 : vector<8x1xf32> to vector<8x8xf32>
    %170 = arith.divf %166, %169 : vector<8x8xf32>
    %171 = vector.extract_strided_slice %1 {offsets = [8, 0], sizes = [8, 4], strides = [1, 1]} : vector<16x4xf32> to vector<8x4xf32>
    %172 = tpu.concatenate %160, %171 in 1 : vector<8x4xf32>, vector<8x4xf32> -> vector<8x8xf32>
    %cst_63 = arith.constant dense<0.000000e+00> : vector<8x8xf32>
    %173 = tpu.matmul %170, %172, %cst_63 {dimension_numbers = #tpu.dot_dimension_numbers<[1], [0], [0], [1], [0, 0, 1, 1], [], []>} : vector<8x8xf32>, vector<8x8xf32>, vector<8x8xf32> -> vector<8x8xf32>
    %174 = vector.extract_strided_slice %173 {offsets = [0, 0], sizes = [8, 4], strides = [1, 1]} : vector<8x8xf32> to vector<8x4xf32>
    %175 = vector.extract_strided_slice %173 {offsets = [0, 4], sizes = [8, 4], strides = [1, 1]} : vector<8x8xf32> to vector<8x4xf32>
    %176 = tpu.concatenate %155, %174 in 0 : vector<8x4xf32>, vector<8x4xf32> -> vector<16x4xf32>
    %177 = tpu.concatenate %156, %175 in 0 : vector<8x4xf32>, vector<8x4xf32> -> vector<16x4xf32>
    %c0_64 = arith.constant 0 : index
    %c1_65 = arith.constant 1 : index
    %c0_66 = arith.constant 0 : index
    %c0_67 = arith.constant 0 : index
    %178 = vector.load %arg12[%c0_64, %c1_65, %c0_66, %c0_67] : memref<1x2x16x4xf32, #tpu.memory_space<vmem>>, vector<1x1x16x4xf32>
    %179 = vector.shape_cast %178 : vector<1x1x16x4xf32> to vector<16x4xf32>
    %180 = vector.shape_cast %177 : vector<16x4xf32> to vector<1x1x16x4xf32>
    tpu.vector_store %arg12[%c0_64, %c1_65, %c0_66, %c0_67], %180 {strides = array<i32>} : memref<1x2x16x4xf32, #tpu.memory_space<vmem>>, vector<1x1x16x4xf32>,
    %c0_68 = arith.constant 0 : index
    %c1_69 = arith.constant 1 : index
    %c0_70 = arith.constant 0 : index
    %c0_71 = arith.constant 0 : index
    %181 = vector.load %arg3[%c0_68, %c1_69, %c0_70, %c0_71] : memref<1x2x4x4xf32, #tpu.memory_space<vmem>>, vector<1x1x4x4xf32>
    %182 = vector.shape_cast %181 : vector<1x1x4x4xf32> to vector<4x4xf32>
    %cst_72 = arith.constant dense<0.000000e+00> : vector<16x4xf32>
    %183 = tpu.matmul %176, %182, %cst_72 {dimension_numbers = #tpu.dot_dimension_numbers<[1], [0], [0], [1], [0, 0, 1, 1], [], []>} : vector<16x4xf32>, vector<4x4xf32>, vector<16x4xf32> -> vector<16x4xf32>
    %184 = vector.broadcast %126 : vector<1x4xf32> to vector<16x4xf32>
    %185 = arith.addf %183, %184 : vector<16x4xf32>
    %186 = arith.addf %122, %185 : vector<16x4xf32>
    %cst_73 = arith.constant dense<0.000000e+00> : vector<16xf32>
    %187 = vector.multi_reduction <add>, %186, %cst_73 [1] : vector<16x4xf32> to vector<16xf32>
    %188 = vector.shape_cast %187 : vector<16xf32> to vector<16x1xf32>
    %cst_74 = arith.constant 4.000000e+00 : f32
    %189 = vector.broadcast %cst_74 : f32 to vector<16x1xf32>
    %190 = arith.divf %188, %189 : vector<16x1xf32>
    %191 = vector.broadcast %190 : vector<16x1xf32> to vector<16x4xf32>
    %192 = arith.subf %186, %191 : vector<16x4xf32>
    %193 = arith.mulf %192, %192 : vector<16x4xf32>
    %cst_75 = arith.constant dense<0.000000e+00> : vector<16xf32>
    %194 = vector.multi_reduction <add>, %193, %cst_75 [1] : vector<16x4xf32> to vector<16xf32>
    %195 = vector.shape_cast %194 : vector<16xf32> to vector<16x1xf32>
    %cst_76 = arith.constant 4.000000e+00 : f32
    %196 = vector.broadcast %cst_76 : f32 to vector<16x1xf32>
    %197 = arith.divf %195, %196 : vector<16x1xf32>
    %198 = vector.broadcast %190 : vector<16x1xf32> to vector<16x4xf32>
    %199 = arith.subf %186, %198 : vector<16x4xf32>
    %cst_77 = arith.constant 9.99999974E-6 : f32
    %200 = vector.broadcast %cst_77 : f32 to vector<16x1xf32>
    %201 = arith.addf %197, %200 : vector<16x1xf32>
    %202 = math.rsqrt %201 : vector<16x1xf32>
    %203 = vector.broadcast %202 : vector<16x1xf32> to vector<16x4xf32>
    %204 = arith.mulf %199, %203 : vector<16x4xf32>
    %205 = vector.broadcast %129 : vector<1x4xf32> to vector<16x4xf32>
    %206 = arith.mulf %204, %205 : vector<16x4xf32>
    %207 = vector.broadcast %130 : vector<1x4xf32> to vector<16x4xf32>
    %208 = arith.addf %206, %207 : vector<16x4xf32>
    %c0_78 = arith.constant 0 : index
    %c1_79 = arith.constant 1 : index
    %c0_80 = arith.constant 0 : index
    %c0_81 = arith.constant 0 : index
    %209 = vector.load %arg4[%c0_78, %c1_79, %c0_80, %c0_81] : memref<1x2x4x8xf32, #tpu.memory_space<vmem>>, vector<1x1x4x8xf32>
    %210 = vector.shape_cast %209 : vector<1x1x4x8xf32> to vector<4x8xf32>
    %cst_82 = arith.constant dense<0.000000e+00> : vector<16x8xf32>
    %211 = tpu.matmul %208, %210, %cst_82 {dimension_numbers = #tpu.dot_dimension_numbers<[1], [0], [0], [1], [0, 0, 1, 1], [], []>} : vector<16x4xf32>, vector<4x8xf32>, vector<16x8xf32> -> vector<16x8xf32>
    %212 = vector.broadcast %127 : vector<1x8xf32> to vector<16x8xf32>
    %213 = arith.addf %211, %212 : vector<16x8xf32>
    %cst_83 = arith.constant 0.000000e+00 : f32
    %214 = vector.broadcast %cst_83 : f32 to vector<16x8xf32>
    %215 = arith.maximumf %213, %214 : vector<16x8xf32>
    %c0_84 = arith.constant 0 : index
    %c1_85 = arith.constant 1 : index
    %c0_86 = arith.constant 0 : index
    %c0_87 = arith.constant 0 : index
    %216 = vector.load %arg5[%c0_84, %c1_85, %c0_86, %c0_87] : memref<1x2x8x4xf32, #tpu.memory_space<vmem>>, vector<1x1x8x4xf32>
    %217 = vector.shape_cast %216 : vector<1x1x8x4xf32> to vector<8x4xf32>
    %cst_88 = arith.constant dense<0.000000e+00> : vector<16x4xf32>
    %218 = tpu.matmul %215, %217, %cst_88 {dimension_numbers = #tpu.dot_dimension_numbers<[1], [0], [0], [1], [0, 0, 1, 1], [], []>} : vector<16x8xf32>, vector<8x4xf32>, vector<16x4xf32> -> vector<16x4xf32>
    %219 = vector.broadcast %128 : vector<1x4xf32> to vector<16x4xf32>
    %220 = arith.addf %218, %219 : vector<16x4xf32>
    %221 = arith.addf %208, %220 : vector<16x4xf32>
    %cst_89 = arith.constant dense<0.000000e+00> : vector<16xf32>
    %222 = vector.multi_reduction <add>, %221, %cst_89 [1] : vector<16x4xf32> to vector<16xf32>
    %223 = vector.shape_cast %222 : vector<16xf32> to vector<16x1xf32>
    %cst_90 = arith.constant 4.000000e+00 : f32
    %224 = vector.broadcast %cst_90 : f32 to vector<16x1xf32>
    %225 = arith.divf %223, %224 : vector<16x1xf32>
    %226 = vector.broadcast %225 : vector<16x1xf32> to vector<16x4xf32>
    %227 = arith.subf %221, %226 : vector<16x4xf32>
    %228 = arith.mulf %227, %227 : vector<16x4xf32>
    %cst_91 = arith.constant dense<0.000000e+00> : vector<16xf32>
    %229 = vector.multi_reduction <add>, %228, %cst_91 [1] : vector<16x4xf32> to vector<16xf32>
    %230 = vector.shape_cast %229 : vector<16xf32> to vector<16x1xf32>
    %cst_92 = arith.constant 4.000000e+00 : f32
    %231 = vector.broadcast %cst_92 : f32 to vector<16x1xf32>
    %232 = arith.divf %230, %231 : vector<16x1xf32>
    %233 = vector.broadcast %225 : vector<16x1xf32> to vector<16x4xf32>
    %234 = arith.subf %221, %233 : vector<16x4xf32>
    %cst_93 = arith.constant 9.99999974E-6 : f32
    %235 = vector.broadcast %cst_93 : f32 to vector<16x1xf32>
    %236 = arith.addf %232, %235 : vector<16x1xf32>
    %237 = math.rsqrt %236 : vector<16x1xf32>
    %238 = vector.broadcast %237 : vector<16x1xf32> to vector<16x4xf32>
    %239 = arith.mulf %234, %238 : vector<16x4xf32>
    %240 = vector.broadcast %131 : vector<1x4xf32> to vector<16x4xf32>
    %241 = arith.mulf %239, %240 : vector<16x4xf32>
    %242 = vector.broadcast %132 : vector<1x4xf32> to vector<16x4xf32>
    %243 = arith.addf %241, %242 : vector<16x4xf32>
    %c0_94 = arith.constant 0 : index
    %c0_95 = arith.constant 0 : index
    %c0_96 = arith.constant 0 : index
    %244 = vector.load %arg11[%c0_94, %c0_95, %c0_96] : memref<1x16x4xf32, #tpu.memory_space<vmem>>, vector<1x16x4xf32>
    %245 = vector.shape_cast %244 : vector<1x16x4xf32> to vector<16x4xf32>
    %246 = vector.shape_cast %243 : vector<16x4xf32> to vector<1x16x4xf32>
    tpu.vector_store %arg11[%c0_94, %c0_95, %c0_96], %246 {strides = array<i32>} : memref<1x16x4xf32, #tpu.memory_space<vmem>>, vector<1x16x4xf32>,
    %247 = vector.extract_strided_slice %243 {offsets = [0, 0], sizes = [1, 4], strides = [1, 1]} : vector<16x4xf32> to vector<1x4xf32>
    %248 = vector.extract_strided_slice %243 {offsets = [1, 0], sizes = [1, 4], strides = [1, 1]} : vector<16x4xf32> to vector<1x4xf32>
    %249 = vector.extract_strided_slice %243 {offsets = [2, 0], sizes = [1, 4], strides = [1, 1]} : vector<16x4xf32> to vector<1x4xf32>
    %250 = vector.extract_strided_slice %243 {offsets = [3, 0], sizes = [1, 4], strides = [1, 1]} : vector<16x4xf32> to vector<1x4xf32>
    %251 = vector.extract_strided_slice %243 {offsets = [4, 0], sizes = [1, 4], strides = [1, 1]} : vector<16x4xf32> to vector<1x4xf32>
    %252 = vector.extract_strided_slice %243 {offsets = [5, 0], sizes = [1, 4], strides = [1, 1]} : vector<16x4xf32> to vector<1x4xf32>
    %253 = vector.extract_strided_slice %243 {offsets = [6, 0], sizes = [1, 4], strides = [1, 1]} : vector<16x4xf32> to vector<1x4xf32>
    %254 = vector.extract_strided_slice %243 {offsets = [7, 0], sizes = [1, 4], strides = [1, 1]} : vector<16x4xf32> to vector<1x4xf32>
    %255 = tpu.concatenate %247, %248, %249, %250, %251, %252, %253, %254 in 1 : vector<1x4xf32>, vector<1x4xf32>, vector<1x4xf32>, vector<1x4xf32>, vector<1x4xf32>, vector<1x4xf32>, vector<1x4xf32>, vector<1x4xf32> -> vector<1x32xf32>
    %256 = vector.extract_strided_slice %243 {offsets = [8, 0], sizes = [1, 4], strides = [1, 1]} : vector<16x4xf32> to vector<1x4xf32>
    %257 = vector.extract_strided_slice %243 {offsets = [9, 0], sizes = [1, 4], strides = [1, 1]} : vector<16x4xf32> to vector<1x4xf32>
    %258 = vector.extract_strided_slice %243 {offsets = [10, 0], sizes = [1, 4], strides = [1, 1]} : vector<16x4xf32> to vector<1x4xf32>
    %259 = vector.extract_strided_slice %243 {offsets = [11, 0], sizes = [1, 4], strides = [1, 1]} : vector<16x4xf32> to vector<1x4xf32>
    %260 = vector.extract_strided_slice %243 {offsets = [12, 0], sizes = [1, 4], strides = [1, 1]} : vector<16x4xf32> to vector<1x4xf32>
    %261 = vector.extract_strided_slice %243 {offsets = [13, 0], sizes = [1, 4], strides = [1, 1]} : vector<16x4xf32> to vector<1x4xf32>
    %262 = vector.extract_strided_slice %243 {offsets = [14, 0], sizes = [1, 4], strides = [1, 1]} : vector<16x4xf32> to vector<1x4xf32>
    %263 = vector.extract_strided_slice %243 {offsets = [15, 0], sizes = [1, 4], strides = [1, 1]} : vector<16x4xf32> to vector<1x4xf32>
    %264 = tpu.concatenate %256, %257, %258, %259, %260, %261, %262, %263 in 1 : vector<1x4xf32>, vector<1x4xf32>, vector<1x4xf32>, vector<1x4xf32>, vector<1x4xf32>, vector<1x4xf32>, vector<1x4xf32>, vector<1x4xf32> -> vector<1x32xf32>
    %265 = tpu.concatenate %255, %264 in 0 : vector<1x32xf32>, vector<1x32xf32> -> vector<2x32xf32>
    %c0_97 = arith.constant 0 : index
    %c0_98 = arith.constant 0 : index
    %c0_99 = arith.constant 0 : index
    %266 = vector.load %arg9[%c0_97, %c0_98, %c0_99] : memref<1x3x256xf32, #tpu.memory_space<vmem>>, vector<1x3x256xf32>
    %267 = vector.shape_cast %266 : vector<1x3x256xf32> to vector<3x256xf32>
    %268 = vector.extract_strided_slice %267 {offsets = [0, 0], sizes = [1, 256], strides = [1, 1]} : vector<3x256xf32> to vector<1x256xf32>
    %269 = vector.extract_strided_slice %267 {offsets = [1, 0], sizes = [1, 128], strides = [1, 1]} : vector<3x256xf32> to vector<1x128xf32>
    %270 = vector.extract_strided_slice %267 {offsets = [2, 0], sizes = [1, 4], strides = [1, 1]} : vector<3x256xf32> to vector<1x4xf32>
    %c0_100 = arith.constant 0 : index
    %c0_101 = arith.constant 0 : index
    %c0_102 = arith.constant 0 : index
    %271 = vector.load %arg7[%c0_100, %c0_101, %c0_102] : memref<1x32x256xf32, #tpu.memory_space<vmem>>, vector<1x32x256xf32>
    %272 = vector.shape_cast %271 : vector<1x32x256xf32> to vector<32x256xf32>
    %cst_103 = arith.constant dense<0.000000e+00> : vector<2x256xf32>
    %273 = tpu.matmul %265, %272, %cst_103 {dimension_numbers = #tpu.dot_dimension_numbers<[1], [0], [0], [1], [0, 0, 1, 1], [], []>} : vector<2x32xf32>, vector<32x256xf32>, vector<2x256xf32> -> vector<2x256xf32>
    %274 = vector.broadcast %268 : vector<1x256xf32> to vector<2x256xf32>
    %275 = arith.addf %273, %274 : vector<2x256xf32>
    %cst_104 = arith.constant 0.000000e+00 : f32
    %276 = vector.broadcast %cst_104 : f32 to vector<2x256xf32>
    %277 = arith.maximumf %275, %276 : vector<2x256xf32>
    %c0_105 = arith.constant 0 : index
    %c0_106 = arith.constant 0 : index
    %c0_107 = arith.constant 0 : index
    %278 = vector.load %arg8[%c0_105, %c0_106, %c0_107] : memref<1x256x128xf32, #tpu.memory_space<vmem>>, vector<1x256x128xf32>
    %279 = vector.shape_cast %278 : vector<1x256x128xf32> to vector<256x128xf32>
    %cst_108 = arith.constant dense<0.000000e+00> : vector<2x128xf32>
    %280 = tpu.matmul %277, %279, %cst_108 {dimension_numbers = #tpu.dot_dimension_numbers<[1], [0], [0], [1], [0, 0, 1, 1], [], []>} : vector<2x256xf32>, vector<256x128xf32>, vector<2x128xf32> -> vector<2x128xf32>
    %281 = vector.broadcast %269 : vector<1x128xf32> to vector<2x128xf32>
    %282 = arith.addf %280, %281 : vector<2x128xf32>
    %c0_109 = arith.constant 0 : index
    %c0_110 = arith.constant 0 : index
    %c0_111 = arith.constant 0 : index
    %283 = vector.load %arg14[%c0_109, %c0_110, %c0_111] : memref<1x2x128xf32, #tpu.memory_space<vmem>>, vector<1x2x128xf32>
    %284 = vector.shape_cast %283 : vector<1x2x128xf32> to vector<2x128xf32>
    %285 = vector.shape_cast %282 : vector<2x128xf32> to vector<1x2x128xf32>
    tpu.vector_store %arg14[%c0_109, %c0_110, %c0_111], %285 {strides = array<i32>} : memref<1x2x128xf32, #tpu.memory_space<vmem>>, vector<1x2x128xf32>,
    %c0_112 = arith.constant 0 : index
    %c0_113 = arith.constant 0 : index
    %c0_114 = arith.constant 0 : index
    %286 = vector.load %arg10[%c0_112, %c0_113, %c0_114] : memref<1x32x4xf32, #tpu.memory_space<vmem>>, vector<1x32x4xf32>
    %287 = vector.shape_cast %286 : vector<1x32x4xf32> to vector<32x4xf32>
    %cst_115 = arith.constant dense<0.000000e+00> : vector<2x4xf32>
    %288 = tpu.matmul %265, %287, %cst_115 {dimension_numbers = #tpu.dot_dimension_numbers<[1], [0], [0], [1], [0, 0, 1, 1], [], []>} : vector<2x32xf32>, vector<32x4xf32>, vector<2x4xf32> -> vector<2x4xf32>
    %289 = vector.broadcast %270 : vector<1x4xf32> to vector<2x4xf32>
    %290 = arith.addf %288, %289 : vector<2x4xf32>
    %c0_116 = arith.constant 0 : index
    %c0_117 = arith.constant 0 : index
    %c0_118 = arith.constant 0 : index
    %291 = vector.load %arg13[%c0_116, %c0_117, %c0_118] : memref<1x2x4xf32, #tpu.memory_space<vmem>>, vector<1x2x4xf32>
    %292 = vector.shape_cast %291 : vector<1x2x4xf32> to vector<2x4xf32>
    %293 = vector.shape_cast %290 : vector<2x4xf32> to vector<1x2x4xf32>
    tpu.vector_store %arg13[%c0_116, %c0_117, %c0_118], %293 {strides = array<i32>} : memref<1x2x4xf32, #tpu.memory_space<vmem>>, vector<1x2x4xf32>,
    return
  }
  func.func @transform_0(%arg0: i32) -> (i32, i32, i32) {
    %c0_i32 = arith.constant 0 : i32
    %c0_i32_0 = arith.constant 0 : i32
    %c0_i32_1 = arith.constant 0 : i32
    return %arg0, %c0_i32, %c0_i32_0 : i32, i32, i32
  }
  func.func @transform_1(%arg0: i32) -> (i32, i32, i32, i32) {
    %c0_i32 = arith.constant 0 : i32
    %c0_i32_0 = arith.constant 0 : i32
    %c0_i32_1 = arith.constant 0 : i32
    %c0_i32_2 = arith.constant 0 : i32
    return %arg0, %c0_i32, %c0_i32_0, %c0_i32_1 : i32, i32, i32, i32
  }
  func.func @transform_2(%arg0: i32) -> (i32, i32, i32, i32) {
    %c0_i32 = arith.constant 0 : i32
    %c0_i32_0 = arith.constant 0 : i32
    %c0_i32_1 = arith.constant 0 : i32
    %c0_i32_2 = arith.constant 0 : i32
    return %arg0, %c0_i32, %c0_i32_0, %c0_i32_1 : i32, i32, i32, i32
  }
  func.func @transform_3(%arg0: i32) -> (i32, i32, i32, i32) {
    %c0_i32 = arith.constant 0 : i32
    %c0_i32_0 = arith.constant 0 : i32
    %c0_i32_1 = arith.constant 0 : i32
    %c0_i32_2 = arith.constant 0 : i32
    return %arg0, %c0_i32, %c0_i32_0, %c0_i32_1 : i32, i32, i32, i32
  }
  func.func @transform_4(%arg0: i32) -> (i32, i32, i32, i32) {
    %c0_i32 = arith.constant 0 : i32
    %c0_i32_0 = arith.constant 0 : i32
    %c0_i32_1 = arith.constant 0 : i32
    %c0_i32_2 = arith.constant 0 : i32
    return %arg0, %c0_i32, %c0_i32_0, %c0_i32_1 : i32, i32, i32, i32
  }
  func.func @transform_5(%arg0: i32) -> (i32, i32, i32, i32) {
    %c0_i32 = arith.constant 0 : i32
    %c0_i32_0 = arith.constant 0 : i32
    %c0_i32_1 = arith.constant 0 : i32
    %c0_i32_2 = arith.constant 0 : i32
    return %arg0, %c0_i32, %c0_i32_0, %c0_i32_1 : i32, i32, i32, i32
  }
  func.func @transform_6(%arg0: i32) -> (i32, i32, i32) {
    %c0_i32 = arith.constant 0 : i32
    %c0_i32_0 = arith.constant 0 : i32
    %c0_i32_1 = arith.constant 0 : i32
    return %arg0, %c0_i32, %c0_i32_0 : i32, i32, i32
  }
  func.func @transform_7(%arg0: i32) -> (i32, i32, i32) {
    %c0_i32 = arith.constant 0 : i32
    %c0_i32_0 = arith.constant 0 : i32
    %c0_i32_1 = arith.constant 0 : i32
    return %arg0, %c0_i32, %c0_i32_0 : i32, i32, i32
  }
  func.func @transform_8(%arg0: i32) -> (i32, i32, i32) {
    %c0_i32 = arith.constant 0 : i32
    %c0_i32_0 = arith.constant 0 : i32
    %c0_i32_1 = arith.constant 0 : i32
    return %arg0, %c0_i32, %c0_i32_0 : i32, i32, i32
  }
  func.func @transform_9(%arg0: i32) -> (i32, i32, i32) {
    %c0_i32 = arith.constant 0 : i32
    %c0_i32_0 = arith.constant 0 : i32
    %c0_i32_1 = arith.constant 0 : i32
    return %arg0, %c0_i32, %c0_i32_0 : i32, i32, i32
  }
  func.func @transform_10(%arg0: i32) -> (i32, i32, i32) {
    %c0_i32 = arith.constant 0 : i32
    %c0_i32_0 = arith.constant 0 : i32
    %c0_i32_1 = arith.constant 0 : i32
    return %arg0, %c0_i32, %c0_i32_0 : i32, i32, i32
  }
  func.func @transform_11(%arg0: i32) -> (i32, i32, i32, i32) {
    %c0_i32 = arith.constant 0 : i32
    %c0_i32_0 = arith.constant 0 : i32
    %c0_i32_1 = arith.constant 0 : i32
    %c0_i32_2 = arith.constant 0 : i32
    return %arg0, %c0_i32, %c0_i32_0, %c0_i32_1 : i32, i32, i32, i32
  }
  func.func @transform_12(%arg0: i32) -> (i32, i32, i32) {
    %c0_i32 = arith.constant 0 : i32
    %c0_i32_0 = arith.constant 0 : i32
    %c0_i32_1 = arith.constant 0 : i32
    return %arg0, %c0_i32, %c0_i32_0 : i32, i32, i32
  }
  func.func @transform_13(%arg0: i32) -> (i32, i32, i32) {
    %c0_i32 = arith.constant 0 : i32
    %c0_i32_0 = arith.constant 0 : i32
    %c0_i32_1 = arith.constant 0 : i32
    return %arg0, %c0_i32, %c0_i32_0 : i32, i32, i32
  }
}

</mosaic_0001>

<llo_original>
// kernel: squeeze.11
$region0: #{squeeze.11}
  %s0 = inlined_call_operand.vmem [shape: f32[1,16,4], index: 0, kind: input, shape index: {}]
  %s1 = inlined_call_operand.hbm [shape: f32[2,32], index: 1, kind: output, shape index: {}]
  $region1: #{squeeze.11} parent=0
    #allocation0 [shape = 'u8[1024]{0}', space=vmem, size = 0x400, scoped, tag = 'operand span for operand 1']
    #allocation1 [shape = 's32[1]{0}', space=sflag, size = 0x4, scoped, tag = 'scoped memory for squeeze.11']
    #allocation2 [shape = 'u8[4096]{0}', space=vmem, size = 0x1000, scoped, tag = 'scoped mem for output reshape']
    %2 = vsyncpa [#allocation1], 0
    %s3 = smov 3
    %v4 = vld [vmem:[%s0] ss:$8 sm:%s3]
    %vm5 = vcmask 31744
    %6 = vst.msk [vmem:[#allocation2] sm:$0x3] %vm5, %v4
    %s7 = scalar_lea.vmem %s0, 7
    %s8 = smov 3
    %v9 = vld [vmem:[%s7] ss:$8 sm:%s8]
    %10 = vrot.lane.b32.xlu0 %v9, 28
    %v11 = vpop.permute.xlu0 %10
    %vm12 = vcmask 261344
    %13 = vst.msk [vmem:[#allocation2] sm:$0x3] %vm12, %v11
    %s14 = scalar_lea.vmem %s0, 6
    %s15 = smov 3
    %v16 = vld [vmem:[%s14] ss:$8 sm:%s15]
    %17 = vrot.lane.b32.xlu0 %v16, 24
    %v18 = vpop.permute.xlu0 %17
    %vm19 = vcmask 228544
    %20 = vst.msk [vmem:[#allocation2] sm:$0x3] %vm19, %v18
    %s21 = scalar_lea.vmem %s0, 5
    %s22 = smov 3
    %v23 = vld [vmem:[%s21] ss:$8 sm:%s22]
    %24 = vrot.lane.b32.xlu0 %v23, 20
    %v25 = vpop.permute.xlu0 %24
    %vm26 = vcmask 195744
    %27 = vst.msk [vmem:[#allocation2] sm:$0x3] %vm26, %v25
    %s28 = scalar_lea.vmem %s0, 4
    %s29 = smov 3
    %v30 = vld [vmem:[%s28] ss:$8 sm:%s29]
    %31 = vrot.lane.b32.xlu0 %v30, 16
    %v32 = vpop.permute.xlu0 %31
    %vm33 = vcmask 162944
    %34 = vst.msk [vmem:[#allocation2] sm:$0x3] %vm33, %v32
    %s35 = scalar_lea.vmem %s0, 3
    %s36 = smov 3
    %v37 = vld [vmem:[%s35] ss:$8 sm:%s36]
    %38 = vrot.lane.b32.xlu0 %v37, 12
    %v39 = vpop.permute.xlu0 %38
    %vm40 = vcmask 130144
    %41 = vst.msk [vmem:[#allocation2] sm:$0x3] %vm40, %v39
    %s42 = scalar_lea.vmem %s0, 2
    %s43 = smov 3
    %v44 = vld [vmem:[%s42] ss:$8 sm:%s43]
    %45 = vrot.lane.b32.xlu0 %v44, 8
    %v46 = vpop.permute.xlu0 %45
    %vm47 = vcmask 97344
    %48 = vst.msk [vmem:[#allocation2] sm:$0x3] %vm47, %v46
    %s49 = scalar_lea.vmem %s0, 1
    %s50 = smov 3
    %v51 = vld [vmem:[%s49] ss:$8 sm:%s50]
    %52 = vrot.lane.b32.xlu0 %v51, 4
    %v53 = vpop.permute.xlu0 %52
    %vm54 = vcmask 64544
    %55 = vst.msk [vmem:[#allocation2] sm:$0x3] %vm54, %v53
    %s57 = ssub.s32 4, 1
    %v58 = vld [vmem:[#allocation2] sm:%s57]
    %s60 = ssub.s32 4, 1
    %61 = vst [vmem:[#allocation0] sm:%s60] %v58
    %63 = vsyncadd [#allocation1], 0
    %s65 = sshll.u32 [#allocation0], 4
    %s66 = int_to_ptr.vmem [resolvable:$true] %s65
    %s67 = sshll.u32 %s1, 4
    %s68 = int_to_ptr.hbm [resolvable:$true] %s67
    %70 = dma.vmem_to_hbm [thread:$0]  %s66, 32, %s68, [#allocation1]
    %72 = dma.done [#allocation1], 32
    %73 = vsyncpa [#allocation1], 1

// kernel: tft_viz_forward.1
$region0: #{tft_viz_forward.1}
  #allocation0 [shape = 'u32[]', space=smem, size = 0x4, offset = 0x4, fixed_abs, tag = 'smem constant byte address 0x4 - core index']
  #allocation1 [shape = 'u32[72,128]{1,0:T(1,128)}', space=vmem, size = 0x9000, scoped, tag = 'internal scratch']
  %s0 = inlined_call_operand.vmem [shape: f32[2,16,4], index: 0, kind: input, shape index: {}]
  %s1 = inlined_call_operand.vmem [shape: f32[2,2,4,12], index: 1, kind: input, shape index: {}]
  %s2 = inlined_call_operand.vmem [shape: f32[2,2,4,4], index: 2, kind: input, shape index: {}]
  %s3 = inlined_call_operand.vmem [shape: f32[2,2,4,8], index: 3, kind: input, shape index: {}]
  %s4 = inlined_call_operand.vmem [shape: f32[2,2,8,4], index: 4, kind: input, shape index: {}]
  %s5 = inlined_call_operand.vmem [shape: f32[2,2,8,12], index: 5, kind: input, shape index: {}]
  %s6 = inlined_call_operand.hbm [shape: f32[2,32,256], index: 6, kind: input, shape index: {}]
  %s7 = inlined_call_operand.hbm [shape: f32[2,256,128], index: 7, kind: input, shape index: {}]
  %s8 = inlined_call_operand.vmem [shape: f32[2,3,256], index: 8, kind: input, shape index: {}]
  %s9 = inlined_call_operand.vmem [shape: f32[2,32,4], index: 9, kind: input, shape index: {}]
  %s10 = inlined_call_operand.vmem [shape: f32[2,16,4], index: 10, kind: output, shape index: {0}]
  %s11 = inlined_call_operand.vmem [shape: f32[2,2,16,4], index: 11, kind: output, shape index: {1}]
  %s12 = inlined_call_operand.vmem [shape: f32[2,2,4], index: 12, kind: output, shape index: {2}]
  %s13 = inlined_call_operand.vmem [shape: f32[2,2,128], index: 13, kind: output, shape index: {3}]
  %14 = xla_tuple %s10, %s11, %s12, %s13
  %s15 = sld [smem:[#allocation0]]
  $region105: #{tft_viz_forward.1} parent=0
    _
  %s17 = ssub.s32 1, %s15
  %s18 = scalar_select 0, %s17, %s15
  $region1: #{tft_viz_forward.1} parent=0
    #allocation2 [shape = 'u8[65536]{0}', space=vmem, size = 0x10000, scoped, tag = 'input window, operand 6']
    #allocation3 [shape = 's32[2]{0}', space=sflag, size = 0x8, scoped, tag = 'scoped memory for tft_viz_forward.1']
    #allocation4 [shape = 'u8[262144]{0}', space=vmem, size = 0x40000, scoped, tag = 'input window, operand 7']
    #allocation5 [shape = 's32[2]{0}', space=sflag, size = 0x8, scoped, tag = 'scoped memory for tft_viz_forward.1']
    %19 = vsyncpa [#allocation3], 0
    %s20 = scalar_lea.sflag [#allocation3], 1
    %21 = vsyncpa %s20, 0
    %22 = vsyncpa [#allocation5], 0
    %s23 = scalar_lea.sflag [#allocation5], 1
    %24 = vsyncpa %s23, 0
    loop: start=0, step=1, limit=4
    $region2: #{tft_viz_forward.1} parent=1 // loop_pre_header
      _
    $region3: #{tft_viz_forward.1} parent=1 // loop_header
      %s26 = sphi 0, %s30
      %p27 = scmp.ge.s32.totalorder %s26, 4
      %s36 = sphi 0, %s38
      %s39 = sphi 0, %s36
      %s40 = sphi 0, %s39
      %s56 = sphi 0, %s40
      %s62 = sphi 0, %s64
      %s65 = sphi 0, %s62
      %s66 = sphi 0, %s65
      %s82 = sphi 0, %s66
      %s88 = sphi 0, %s90
      %s91 = sphi 0, %s88
      %s92 = sphi 0, %s91
      %s108 = sphi 0, %s92
      %s114 = sphi 0, %s116
      %s117 = sphi 0, %s114
      %s118 = sphi 0, %s117
      %s134 = sphi 0, %s118
      %s140 = sphi 0, %s142
      %s143 = sphi 0, %s140
      %s144 = sphi 0, %s143
      %s160 = sphi 0, %s144
      %s166 = sphi 0, %s168
      %s169 = sphi 0, %s166
      %s170 = sphi 0, %s169
      %s186 = sphi 0, %s170
      %s192 = sphi 0, %s194
      %s195 = sphi 0, %s192
      %s196 = sphi 0, %s195
      %s212 = sphi 0, %s196
      %s218 = sphi 0, %s220
      %s221 = sphi 0, %s218
      %s222 = sphi 0, %s221
      %s238 = sphi 0, %s222
      %s244 = sphi 0, %s246
      %s247 = sphi 0, %s244
      %s248 = sphi 0, %s247
      %s264 = sphi 0, %s248
      %s270 = sphi 0, %s272
      %s273 = sphi 0, %s270
      %s274 = sphi 0, %s273
      %s290 = sphi 0, %s274
      %s296 = sphi 0, %s298
      %s299 = sphi 0, %s296
      %s300 = sphi 0, %s299
      %s316 = sphi 0, %s300
      %s322 = sphi 0, %s324
      %s325 = sphi 0, %s322
      %s326 = sphi 0, %s325
      %s342 = sphi 0, %s326
      %s348 = sphi 0, %s350
      %s351 = sphi 0, %s348
      %s352 = sphi 0, %s351
      %s368 = sphi 0, %s352
      %s374 = sphi 0, %s376
      %s377 = sphi 0, %s374
      %s378 = sphi 0, %s377
      %s394 = sphi 0, %s378
    $region4: #{tft_viz_forward.1} parent=1 // loop_header_branch
      %29 = sbr.rel (%p27) target = $region8
    $region5: #{tft_viz_forward.1} parent=1 // loop_body
      %s31 = ssub.s32 %s26, 1
      %s32 = ssub.s32 %s26, 2
      %s33 = sadd.s32 %s26, 1
      %s34 = ssub.s32 %s26, %s33
      %p35 = scmp.eq.s32.totalorder %s34, 0
      %s37 = sadd.s32 %s36, 1
      %s38 = scalar_select %p35, %s36, %s37
      %p41 = pneg %p35
      %p42 = scmp.eq.s32.totalorder %s26, 1
      %p43 = por %p41, %p42
      %p44 = scmp.ne.s32.totalorder %s36, %s39
      %p45 = scmp.eq.s32.totalorder %s26, 0
      %p46 = por %p44, %p45
      %p47 = scmp.ne.s32.totalorder %s36, %s39
      %p48 = scmp.eq.s32.totalorder %s31, 1
      %p49 = por %p47, %p48
      %p50 = scmp.ne.s32.totalorder %s39, %s40
      %p51 = scmp.eq.s32.totalorder %s31, 0
      %p52 = por %p50, %p51
      %p53 = scmp.ne.s32.totalorder %s39, %s40
      %p54 = scmp.eq.s32.totalorder %s32, 1
      %p55 = por %p53, %p54
      %p57 = scmp.ne.s32.totalorder %s40, %s56
      %p58 = scmp.eq.s32.totalorder %s32, 0
      %p59 = por %p57, %p58
      %s60 = ssub.s32 %s26, %s33
      %p61 = scmp.eq.s32.totalorder %s60, 0
      %s63 = sadd.s32 %s62, 1
      %s64 = scalar_select %p61, %s62, %s63
      %p67 = pneg %p61
      %p68 = scmp.eq.s32.totalorder %s26, 1
      %p69 = por %p67, %p68
      %p70 = scmp.ne.s32.totalorder %s62, %s65
      %p71 = scmp.eq.s32.totalorder %s26, 0
      %p72 = por %p70, %p71
      %p73 = scmp.ne.s32.totalorder %s62, %s65
      %p74 = scmp.eq.s32.totalorder %s31, 1
      %p75 = por %p73, %p74
      %p76 = scmp.ne.s32.totalorder %s65, %s66
      %p77 = scmp.eq.s32.totalorder %s31, 0
      %p78 = por %p76, %p77
      %p79 = scmp.ne.s32.totalorder %s65, %s66
      %p80 = scmp.eq.s32.totalorder %s32, 1
      %p81 = por %p79, %p80
      %p83 = scmp.ne.s32.totalorder %s66, %s82
      %p84 = scmp.eq.s32.totalorder %s32, 0
      %p85 = por %p83, %p84
      %s86 = ssub.s32 %s26, %s33
      %p87 = scmp.eq.s32.totalorder %s86, 0
      %s89 = sadd.s32 %s88, 1
      %s90 = scalar_select %p87, %s88, %s89
      %p93 = pneg %p87
      %p94 = scmp.eq.s32.totalorder %s26, 1
      %p95 = por %p93, %p94
      %p96 = scmp.ne.s32.totalorder %s88, %s91
      %p97 = scmp.eq.s32.totalorder %s26, 0
      %p98 = por %p96, %p97
      %p99 = scmp.ne.s32.totalorder %s88, %s91
      %p100 = scmp.eq.s32.totalorder %s31, 1
      %p101 = por %p99, %p100
      %p102 = scmp.ne.s32.totalorder %s91, %s92
      %p103 = scmp.eq.s32.totalorder %s31, 0
      %p104 = por %p102, %p103
      %p105 = scmp.ne.s32.totalorder %s91, %s92
      %p106 = scmp.eq.s32.totalorder %s32, 1
      %p107 = por %p105, %p106
      %p109 = scmp.ne.s32.totalorder %s92, %s108
      %p110 = scmp.eq.s32.totalorder %s32, 0
      %p111 = por %p109, %p110
      %s112 = ssub.s32 %s26, %s33
      %p113 = scmp.eq.s32.totalorder %s112, 0
      %s115 = sadd.s32 %s114, 1
      %s116 = scalar_select %p113, %s114, %s115
      %p119 = pneg %p113
      %p120 = scmp.eq.s32.totalorder %s26, 1
      %p121 = por %p119, %p120
      %p122 = scmp.ne.s32.totalorder %s114, %s117
      %p123 = scmp.eq.s32.totalorder %s26, 0
      %p124 = por %p122, %p123
      %p125 = scmp.ne.s32.totalorder %s114, %s117
      %p126 = scmp.eq.s32.totalorder %s31, 1
      %p127 = por %p125, %p126
      %p128 = scmp.ne.s32.totalorder %s117, %s118
      %p129 = scmp.eq.s32.totalorder %s31, 0
      %p130 = por %p128, %p129
      %p131 = scmp.ne.s32.totalorder %s117, %s118
      %p132 = scmp.eq.s32.totalorder %s32, 1
      %p133 = por %p131, %p132
      %p135 = scmp.ne.s32.totalorder %s118, %s134
      %p136 = scmp.eq.s32.totalorder %s32, 0
      %p137 = por %p135, %p136
      %s138 = ssub.s32 %s26, %s33
      %p139 = scmp.eq.s32.totalorder %s138, 0
      %s141 = sadd.s32 %s140, 1
      %s142 = scalar_select %p139, %s140, %s141
      %p145 = pneg %p139
      %p146 = scmp.eq.s32.totalorder %s26, 1
      %p147 = por %p145, %p146
      %p148 = scmp.ne.s32.totalorder %s140, %s143
      %p149 = scmp.eq.s32.totalorder %s26, 0
      %p150 = por %p148, %p149
      %p151 = scmp.ne.s32.totalorder %s140, %s143
      %p152 = scmp.eq.s32.totalorder %s31, 1
      %p153 = por %p151, %p152
      %p154 = scmp.ne.s32.totalorder %s143, %s144
      %p155 = scmp.eq.s32.totalorder %s31, 0
      %p156 = por %p154, %p155
      %p157 = scmp.ne.s32.totalorder %s143, %s144
      %p158 = scmp.eq.s32.totalorder %s32, 1
      %p159 = por %p157, %p158
      %p161 = scmp.ne.s32.totalorder %s144, %s160
      %p162 = scmp.eq.s32.totalorder %s32, 0
      %p163 = por %p161, %p162
      %s164 = ssub.s32 %s26, %s33
      %p165 = scmp.eq.s32.totalorder %s164, 0
      %s167 = sadd.s32 %s166, 1
      %s168 = scalar_select %p165, %s166, %s167
      %p171 = pneg %p165
      %p172 = scmp.eq.s32.totalorder %s26, 1
      %p173 = por %p171, %p172
      %p174 = scmp.ne.s32.totalorder %s166, %s169
      %p175 = scmp.eq.s32.totalorder %s26, 0
      %p176 = por %p174, %p175
      %p177 = scmp.ne.s32.totalorder %s166, %s169
      %p178 = scmp.eq.s32.totalorder %s31, 1
      %p179 = por %p177, %p178
      %p180 = scmp.ne.s32.totalorder %s169, %s170
      %p181 = scmp.eq.s32.totalorder %s31, 0
      %p182 = por %p180, %p181
      %p183 = scmp.ne.s32.totalorder %s169, %s170
      %p184 = scmp.eq.s32.totalorder %s32, 1
      %p185 = por %p183, %p184
      %p187 = scmp.ne.s32.totalorder %s170, %s186
      %p188 = scmp.eq.s32.totalorder %s32, 0
      %p189 = por %p187, %p188
      %s190 = ssub.s32 %s26, %s33
      %p191 = scmp.eq.s32.totalorder %s190, 0
      %s193 = sadd.s32 %s192, 1
      %s194 = scalar_select %p191, %s192, %s193
      %p197 = pneg %p191
      %p198 = scmp.eq.s32.totalorder %s26, 1
      %p199 = por %p197, %p198
      %p200 = scmp.ne.s32.totalorder %s192, %s195
      %p201 = scmp.eq.s32.totalorder %s26, 0
      %p202 = por %p200, %p201
      %p203 = scmp.ne.s32.totalorder %s192, %s195
      %p204 = scmp.eq.s32.totalorder %s31, 1
      %p205 = por %p203, %p204
      %p206 = scmp.ne.s32.totalorder %s195, %s196
      %p207 = scmp.eq.s32.totalorder %s31, 0
      %p208 = por %p206, %p207
      %p209 = scmp.ne.s32.totalorder %s195, %s196
      %p210 = scmp.eq.s32.totalorder %s32, 1
      %p211 = por %p209, %p210
      %p213 = scmp.ne.s32.totalorder %s196, %s212
      %p214 = scmp.eq.s32.totalorder %s32, 0
      %p215 = por %p213, %p214
      %s216 = ssub.s32 %s26, %s33
      %p217 = scmp.eq.s32.totalorder %s216, 0
      %s219 = sadd.s32 %s218, 1
      %s220 = scalar_select %p217, %s218, %s219
      %p223 = pneg %p217
      %p224 = scmp.eq.s32.totalorder %s26, 1
      %p225 = por %p223, %p224
      %p226 = scmp.ne.s32.totalorder %s218, %s221
      %p227 = scmp.eq.s32.totalorder %s26, 0
      %p228 = por %p226, %p227
      %p229 = scmp.ne.s32.totalorder %s218, %s221
      %p230 = scmp.eq.s32.totalorder %s31, 1
      %p231 = por %p229, %p230
      %p232 = scmp.ne.s32.totalorder %s221, %s222
      %p233 = scmp.eq.s32.totalorder %s31, 0
      %p234 = por %p232, %p233
      %p235 = scmp.ne.s32.totalorder %s221, %s222
      %p236 = scmp.eq.s32.totalorder %s32, 1
      %p237 = por %p235, %p236
      %p239 = scmp.ne.s32.totalorder %s222, %s238
      %p240 = scmp.eq.s32.totalorder %s32, 0
      %p241 = por %p239, %p240
      %s242 = ssub.s32 %s26, %s33
      %p243 = scmp.eq.s32.totalorder %s242, 0
      %s245 = sadd.s32 %s244, 1
      %s246 = scalar_select %p243, %s244, %s245
      %p249 = pneg %p243
      %p250 = scmp.eq.s32.totalorder %s26, 1
      %p251 = por %p249, %p250
      %p252 = scmp.ne.s32.totalorder %s244, %s247
      %p253 = scmp.eq.s32.totalorder %s26, 0
      %p254 = por %p252, %p253
      %p255 = scmp.ne.s32.totalorder %s244, %s247
      %p256 = scmp.eq.s32.totalorder %s31, 1
      %p257 = por %p255, %p256
      %p258 = scmp.ne.s32.totalorder %s247, %s248
      %p259 = scmp.eq.s32.totalorder %s31, 0
      %p260 = por %p258, %p259
      %p261 = scmp.ne.s32.totalorder %s247, %s248
      %p262 = scmp.eq.s32.totalorder %s32, 1
      %p263 = por %p261, %p262
      %p265 = scmp.ne.s32.totalorder %s248, %s264
      %p266 = scmp.eq.s32.totalorder %s32, 0
      %p267 = por %p265, %p266
      %s268 = ssub.s32 %s26, %s33
      %p269 = scmp.eq.s32.totalorder %s268, 0
      %s271 = sadd.s32 %s270, 1
      %s272 = scalar_select %p269, %s270, %s271
      %p275 = pneg %p269
      %p276 = scmp.eq.s32.totalorder %s26, 1
      %p277 = por %p275, %p276
      %p278 = scmp.ne.s32.totalorder %s270, %s273
      %p279 = scmp.eq.s32.totalorder %s26, 0
      %p280 = por %p278, %p279
      %p281 = scmp.ne.s32.totalorder %s270, %s273
      %p282 = scmp.eq.s32.totalorder %s31, 1
      %p283 = por %p281, %p282
      %p284 = scmp.ne.s32.totalorder %s273, %s274
      %p285 = scmp.eq.s32.totalorder %s31, 0
      %p286 = por %p284, %p285
      %p287 = scmp.ne.s32.totalorder %s273, %s274
      %p288 = scmp.eq.s32.totalorder %s32, 1
      %p289 = por %p287, %p288
      %p291 = scmp.ne.s32.totalorder %s274, %s290
      %p292 = scmp.eq.s32.totalorder %s32, 0
      %p293 = por %p291, %p292
      %s294 = ssub.s32 %s26, %s33
      %p295 = scmp.eq.s32.totalorder %s294, 0
      %s297 = sadd.s32 %s296, 1
      %s298 = scalar_select %p295, %s296, %s297
      %p301 = pneg %p295
      %p302 = scmp.eq.s32.totalorder %s26, 1
      %p303 = por %p301, %p302
      %p304 = scmp.ne.s32.totalorder %s296, %s299
      %p305 = scmp.eq.s32.totalorder %s26, 0
      %p306 = por %p304, %p305
      %p307 = scmp.ne.s32.totalorder %s296, %s299
      %p308 = scmp.eq.s32.totalorder %s31, 1
      %p309 = por %p307, %p308
      %p310 = scmp.ne.s32.totalorder %s299, %s300
      %p311 = scmp.eq.s32.totalorder %s31, 0
      %p312 = por %p310, %p311
      %p313 = scmp.ne.s32.totalorder %s299, %s300
      %p314 = scmp.eq.s32.totalorder %s32, 1
      %p315 = por %p313, %p314
      %p317 = scmp.ne.s32.totalorder %s300, %s316
      %p318 = scmp.eq.s32.totalorder %s32, 0
      %p319 = por %p317, %p318
      %s320 = ssub.s32 %s26, %s33
      %p321 = scmp.eq.s32.totalorder %s320, 0
      %s323 = sadd.s32 %s322, 1
      %s324 = scalar_select %p321, %s322, %s323
      %p327 = pneg %p321
      %p328 = scmp.eq.s32.totalorder %s26, 1
      %p329 = por %p327, %p328
      %p330 = scmp.ne.s32.totalorder %s322, %s325
      %p331 = scmp.eq.s32.totalorder %s26, 0
      %p332 = por %p330, %p331
      %p333 = scmp.ne.s32.totalorder %s322, %s325
      %p334 = scmp.eq.s32.totalorder %s31, 1
      %p335 = por %p333, %p334
      %p336 = scmp.ne.s32.totalorder %s325, %s326
      %p337 = scmp.eq.s32.totalorder %s31, 0
      %p338 = por %p336, %p337
      %p339 = scmp.ne.s32.totalorder %s325, %s326
      %p340 = scmp.eq.s32.totalorder %s32, 1
      %p341 = por %p339, %p340
      %p343 = scmp.ne.s32.totalorder %s326, %s342
      %p344 = scmp.eq.s32.totalorder %s32, 0
      %p345 = por %p343, %p344
      %s346 = ssub.s32 %s26, %s33
      %p347 = scmp.eq.s32.totalorder %s346, 0
      %s349 = sadd.s32 %s348, 1
      %s350 = scalar_select %p347, %s348, %s349
      %p353 = pneg %p347
      %p354 = scmp.eq.s32.totalorder %s26, 1
      %p355 = por %p353, %p354
      %p356 = scmp.ne.s32.totalorder %s348, %s351
      %p357 = scmp.eq.s32.totalorder %s26, 0
      %p358 = por %p356, %p357
      %p359 = scmp.ne.s32.totalorder %s348, %s351
      %p360 = scmp.eq.s32.totalorder %s31, 1
      %p361 = por %p359, %p360
      %p362 = scmp.ne.s32.totalorder %s351, %s352
      %p363 = scmp.eq.s32.totalorder %s31, 0
      %p364 = por %p362, %p363
      %p365 = scmp.ne.s32.totalorder %s351, %s352
      %p366 = scmp.eq.s32.totalorder %s32, 1
      %p367 = por %p365, %p366
      %p369 = scmp.ne.s32.totalorder %s352, %s368
      %p370 = scmp.eq.s32.totalorder %s32, 0
      %p371 = por %p369, %p370
      %s372 = ssub.s32 %s26, %s33
      %p373 = scmp.eq.s32.totalorder %s372, 0
      %s375 = sadd.s32 %s374, 1
      %s376 = scalar_select %p373, %s374, %s375
      %p379 = pneg %p373
      %p380 = scmp.eq.s32.totalorder %s26, 1
      %p381 = por %p379, %p380
      %p382 = scmp.ne.s32.totalorder %s374, %s377
      %p383 = scmp.eq.s32.totalorder %s26, 0
      %p384 = por %p382, %p383
      %p385 = scmp.ne.s32.totalorder %s374, %s377
      %p386 = scmp.eq.s32.totalorder %s31, 1
      %p387 = por %p385, %p386
      %p388 = scmp.ne.s32.totalorder %s377, %s378
      %p389 = scmp.eq.s32.totalorder %s31, 0
      %p390 = por %p388, %p389
      %p391 = scmp.ne.s32.totalorder %s377, %s378
      %p392 = scmp.eq.s32.totalorder %s32, 1
      %p393 = por %p391, %p392
      %p395 = scmp.ne.s32.totalorder %s378, %s394
      %p396 = scmp.eq.s32.totalorder %s32, 0
      %p397 = por %p395, %p396
      %p398 = scmp.le.s32.totalorder 1, %s26
      %p399 = scmp.lt.s32.totalorder %s26, 3
      %p400 = pnand %p398, %p399
      %p401 = pneg %p400
      // Predicated region
      $region9: #{tft_viz_forward.1} parent=5 // pred_check
        _
      $region10: #{tft_viz_forward.1} parent=5 // pred_check_branch
        %403 = sbr.rel (%p400) target = $region12
      $region11: #{tft_viz_forward.1} parent=5 // pred_region
        %s404 = ssub.s32 %s26, 1
      $region12: #{tft_viz_forward.1} parent=5 // pred_fallthru
        _
      %p405 = scmp.lt.s32.totalorder %s26, 2
      // Predicated region
      $region13: #{tft_viz_forward.1} parent=5 // pred_check
        %p406 = pneg %p405
      $region14: #{tft_viz_forward.1} parent=5 // pred_check_branch
        %408 = sbr.rel (%p406) target = $region16
      $region15: #{tft_viz_forward.1} parent=5 // pred_region
        // Predicated region
        $region17: #{tft_viz_forward.1} parent=15 // pred_check
          %p409 = pneg %p46
        $region18: #{tft_viz_forward.1} parent=15 // pred_check_branch
          %411 = sbr.rel (%p409) target = $region20
        $region19: #{tft_viz_forward.1} parent=15 // pred_region
          %p412 = scmp.lt.s32.totalorder %s26, 1
          %s413 = scalar_select %p412, %s26, 1
          %s414 = smul.addr %s413, 2
          %s415 = smul.addr %s414, 8
          %s416 = scalar_lea.vmem %s0, %s415
        $region20: #{tft_viz_forward.1} parent=15 // pred_fallthru
          _
        // Predicated region
        $region21: #{tft_viz_forward.1} parent=15 // pred_check
          %p417 = pneg %p72
        $region22: #{tft_viz_forward.1} parent=15 // pred_check_branch
          %419 = sbr.rel (%p417) target = $region24
        $region23: #{tft_viz_forward.1} parent=15 // pred_region
          %p420 = scmp.lt.s32.totalorder %s26, 1
          %s421 = scalar_select %p420, %s26, 1
          %s422 = smul.addr %s421, 2
          %s423 = smul.addr %s422, 4
          %s424 = scalar_lea.vmem %s1, %s423
        $region24: #{tft_viz_forward.1} parent=15 // pred_fallthru
          _
        // Predicated region
        $region25: #{tft_viz_forward.1} parent=15 // pred_check
          %p425 = pneg %p98
        $region26: #{tft_viz_forward.1} parent=15 // pred_check_branch
          %427 = sbr.rel (%p425) target = $region28
        $region27: #{tft_viz_forward.1} parent=15 // pred_region
          %p428 = scmp.lt.s32.totalorder %s26, 1
          %s429 = scalar_select %p428, %s26, 1
          %s430 = smul.addr %s429, 2
          %s431 = smul.addr %s430, 4
          %s432 = scalar_lea.vmem %s2, %s431
        $region28: #{tft_viz_forward.1} parent=15 // pred_fallthru
          _
        // Predicated region
        $region29: #{tft_viz_forward.1} parent=15 // pred_check
          %p433 = pneg %p124
        $region30: #{tft_viz_forward.1} parent=15 // pred_check_branch
          %435 = sbr.rel (%p433) target = $region32
        $region31: #{tft_viz_forward.1} parent=15 // pred_region
          %p436 = scmp.lt.s32.totalorder %s26, 1
          %s437 = scalar_select %p436, %s26, 1
          %s438 = smul.addr %s437, 2
          %s439 = smul.addr %s438, 4
          %s440 = scalar_lea.vmem %s3, %s439
        $region32: #{tft_viz_forward.1} parent=15 // pred_fallthru
          _
        // Predicated region
        $region33: #{tft_viz_forward.1} parent=15 // pred_check
          %p441 = pneg %p150
        $region34: #{tft_viz_forward.1} parent=15 // pred_check_branch
          %443 = sbr.rel (%p441) target = $region36
        $region35: #{tft_viz_forward.1} parent=15 // pred_region
          %p444 = scmp.lt.s32.totalorder %s26, 1
          %s445 = scalar_select %p444, %s26, 1
          %s446 = smul.addr %s445, 2
          %s447 = smul.addr %s446, 8
          %s448 = scalar_lea.vmem %s4, %s447
        $region36: #{tft_viz_forward.1} parent=15 // pred_fallthru
          _
        // Predicated region
        $region37: #{tft_viz_forward.1} parent=15 // pred_check
          %p449 = pneg %p176
        $region38: #{tft_viz_forward.1} parent=15 // pred_check_branch
          %451 = sbr.rel (%p449) target = $region40
        $region39: #{tft_viz_forward.1} parent=15 // pred_region
          %p452 = scmp.lt.s32.totalorder %s26, 1
          %s453 = scalar_select %p452, %s26, 1
          %s454 = smul.addr %s453, 2
          %s455 = smul.addr %s454, 8
          %s456 = scalar_lea.vmem %s5, %s455
        $region40: #{tft_viz_forward.1} parent=15 // pred_fallthru
          _
        // Predicated region
        $region41: #{tft_viz_forward.1} parent=15 // pred_check
          %p457 = pneg %p202
        $region42: #{tft_viz_forward.1} parent=15 // pred_check_branch
          %459 = sbr.rel (%p457) target = $region44
        $region43: #{tft_viz_forward.1} parent=15 // pred_region
          %s460 = sand.u32 %s192, 1
          %s461 = scalar_lea.sflag [#allocation3], %s460
          %s462 = sand.u32 %s192, 1
          %s463 = smul.addr %s462, 64
          %s464 = scalar_lea.vmem [#allocation2], %s463
          %466 = vsyncadd %s461, 0
          %s467 = smul.addr %s26, 8
          %s468 = smul.addr %s467, 8
          %s469 = scalar_lea.hbm %s6, %s468
          %s470 = sshll.u32 %s469, 4
          %s471 = int_to_ptr.hbm [resolvable:$true] %s470
          %s472 = sshll.u32 %s464, 4
          %s473 = int_to_ptr.vmem [resolvable:$true] %s472
          %478 = dma.hbm_to_vmem [thread:$0]  %s471, 1024, %s473, %s461, 256, 256, 16
        $region44: #{tft_viz_forward.1} parent=15 // pred_fallthru
          _
        // Predicated region
        $region45: #{tft_viz_forward.1} parent=15 // pred_check
          %p479 = pneg %p228
        $region46: #{tft_viz_forward.1} parent=15 // pred_check_branch
          %481 = sbr.rel (%p479) target = $region48
        $region47: #{tft_viz_forward.1} parent=15 // pred_region
          %s482 = sand.u32 %s218, 1
          %s483 = scalar_lea.sflag [#allocation5], %s482
          %s484 = sand.u32 %s218, 1
          %s485 = smul.addr %s484, 256
          %s486 = scalar_lea.vmem [#allocation4], %s485
          %488 = vsyncadd %s483, 0
          %s489 = smul.addr %s26, 32
          %s490 = smul.addr %s489, 8
          %s491 = scalar_lea.hbm %s7, %s490
          %s492 = sshll.u32 %s491, 4
          %s493 = int_to_ptr.hbm [resolvable:$true] %s492
          %s494 = sshll.u32 %s486, 4
          %s495 = int_to_ptr.vmem [resolvable:$true] %s494
          %500 = dma.hbm_to_vmem [thread:$0]  %s493, 4096, %s495, %s483, 128, 128, 8
        $region48: #{tft_viz_forward.1} parent=15 // pred_fallthru
          _
        // Predicated region
        $region49: #{tft_viz_forward.1} parent=15 // pred_check
          %p501 = pneg %p254
        $region50: #{tft_viz_forward.1} parent=15 // pred_check_branch
          %503 = sbr.rel (%p501) target = $region52
        $region51: #{tft_viz_forward.1} parent=15 // pred_region
          %p504 = scmp.lt.s32.totalorder %s26, 1
          %s505 = scalar_select %p504, %s26, 1
          %s506 = smul.addr %s505, 2
          %s507 = smul.addr %s506, 4
          %s508 = scalar_lea.vmem %s8, %s507
        $region52: #{tft_viz_forward.1} parent=15 // pred_fallthru
          _
        // Predicated region
        $region53: #{tft_viz_forward.1} parent=15 // pred_check
          %p509 = pneg %p280
        $region54: #{tft_viz_forward.1} parent=15 // pred_check_branch
          %511 = sbr.rel (%p509) target = $region56
        $region55: #{tft_viz_forward.1} parent=15 // pred_region
          %p512 = scmp.lt.s32.totalorder %s26, 1
          %s513 = scalar_select %p512, %s26, 1
          %s514 = smul.addr %s513, 4
          %s515 = smul.addr %s514, 8
          %s516 = scalar_lea.vmem %s9, %s515
        $region56: #{tft_viz_forward.1} parent=15 // pred_fallthru
          _
      $region16: #{tft_viz_forward.1} parent=5 // pred_fallthru
        _
      %p517 = scmp.le.s32.totalorder 1, %s26
      %p518 = scmp.lt.s32.totalorder %s26, 3
      %p519 = pnand %p517, %p518
      %p520 = pneg %p519
      // Predicated region
      $region57: #{tft_viz_forward.1} parent=5 // pred_check
        _
      $region58: #{tft_viz_forward.1} parent=5 // pred_check_branch
        %522 = sbr.rel (%p519) target = $region60
      $region59: #{tft_viz_forward.1} parent=5 // pred_region
        %s523 = ssub.s32 %s26, 1
        %s524 = sand.u32 %s195, 1
        %s525 = scalar_lea.sflag [#allocation3], %s524
        %s526 = sand.u32 %s195, 1
        %s527 = smul.addr %s526, 64
        %s528 = scalar_lea.vmem [#allocation2], %s527
        // Predicated region
        $region61: #{tft_viz_forward.1} parent=59 // pred_check
          %p529 = pneg %p208
        $region62: #{tft_viz_forward.1} parent=59 // pred_check_branch
          %531 = sbr.rel (%p529) target = $region64
        $region63: #{tft_viz_forward.1} parent=59 // pred_region
          %533 = dma.done %s525, 1024
        $region64: #{tft_viz_forward.1} parent=59 // pred_fallthru
          _
        %s534 = sand.u32 %s221, 1
        %s535 = scalar_lea.sflag [#allocation5], %s534
        %s536 = sand.u32 %s221, 1
        %s537 = smul.addr %s536, 256
        %s538 = scalar_lea.vmem [#allocation4], %s537
        // Predicated region
        $region65: #{tft_viz_forward.1} parent=59 // pred_check
          %p539 = pneg %p234
        $region66: #{tft_viz_forward.1} parent=59 // pred_check_branch
          %541 = sbr.rel (%p539) target = $region68
        $region67: #{tft_viz_forward.1} parent=59 // pred_region
          %543 = dma.done %s535, 4096
        $region68: #{tft_viz_forward.1} parent=59 // pred_fallthru
          _
        %p544 = scmp.lt.s32.totalorder %s31, 1
        %s545 = scalar_select %p544, %s31, 1
        %s546 = smul.addr %s545, 2
        %s547 = smul.addr %s546, 8
        %s548 = scalar_lea.vmem %s0, %s547
        %p549 = pneg %p52
        %p550 = pneg %p49
        %p551 = scmp.lt.s32.totalorder %s31, 1
        %s552 = scalar_select %p551, %s31, 1
        %s553 = smul.addr %s552, 2
        %s554 = smul.addr %s553, 4
        %s555 = scalar_lea.vmem %s1, %s554
        %p556 = pneg %p78
        %p557 = pneg %p75
        %p558 = scmp.lt.s32.totalorder %s31, 1
        %s559 = scalar_select %p558, %s31, 1
        %s560 = smul.addr %s559, 2
        %s561 = smul.addr %s560, 4
        %s562 = scalar_lea.vmem %s2, %s561
        %p563 = pneg %p104
        %p564 = pneg %p101
        %p565 = scmp.lt.s32.totalorder %s31, 1
        %s566 = scalar_select %p565, %s31, 1
        %s567 = smul.addr %s566, 2
        %s568 = smul.addr %s567, 4
        %s569 = scalar_lea.vmem %s3, %s568
        %p570 = pneg %p130
        %p571 = pneg %p127
        %p572 = scmp.lt.s32.totalorder %s31, 1
        %s573 = scalar_select %p572, %s31, 1
        %s574 = smul.addr %s573, 2
        %s575 = smul.addr %s574, 8
        %s576 = scalar_lea.vmem %s4, %s575
        %p577 = pneg %p156
        %p578 = pneg %p153
        %p579 = scmp.lt.s32.totalorder %s31, 1
        %s580 = scalar_select %p579, %s31, 1
        %s581 = smul.addr %s580, 2
        %s582 = smul.addr %s581, 8
        %s583 = scalar_lea.vmem %s5, %s582
        %p584 = pneg %p182
        %p585 = pneg %p179
        %s586 = sand.u32 %s195, 1
        %s587 = scalar_lea.sflag [#allocation3], %s586
        %s588 = sand.u32 %s195, 1
        %s589 = smul.addr %s588, 64
        %s590 = scalar_lea.vmem [#allocation2], %s589
        %p591 = pneg %p208
        %p592 = pneg %p205
        %s593 = sand.u32 %s221, 1
        %s594 = scalar_lea.sflag [#allocation5], %s593
        %s595 = sand.u32 %s221, 1
        %s596 = smul.addr %s595, 256
        %s597 = scalar_lea.vmem [#allocation4], %s596
        %p598 = pneg %p234
        %p599 = pneg %p231
        %p600 = scmp.lt.s32.totalorder %s31, 1
        %s601 = scalar_select %p600, %s31, 1
        %s602 = smul.addr %s601, 2
        %s603 = smul.addr %s602, 4
        %s604 = scalar_lea.vmem %s8, %s603
        %p605 = pneg %p260
        %p606 = pneg %p257
        %p607 = scmp.lt.s32.totalorder %s31, 1
        %s608 = scalar_select %p607, %s31, 1
        %s609 = smul.addr %s608, 4
        %s610 = smul.addr %s609, 8
        %s611 = scalar_lea.vmem %s9, %s610
        %p612 = pneg %p286
        %p613 = pneg %p283
        %p614 = pneg %p312
        %p615 = pneg %p309
        %p616 = scmp.lt.s32.totalorder %s31, 1
        %s617 = scalar_select %p616, %s31, 1
        %s618 = smul.addr %s617, 2
        %s619 = smul.addr %s618, 8
        %s620 = scalar_lea.vmem %s10, %s619
        %p621 = pneg %p338
        %p622 = pneg %p335
        %p623 = scmp.lt.s32.totalorder %s31, 1
        %s624 = scalar_select %p623, %s31, 1
        %s625 = smul.addr %s624, 4
        %s626 = smul.addr %s625, 8
        %s627 = scalar_lea.vmem %s11, %s626
        %p628 = pneg %p364
        %p629 = pneg %p361
        %p630 = scmp.lt.s32.totalorder %s31, 1
        %s631 = scalar_select %p630, %s31, 1
        %s632 = smul.addr %s631, 2
        %s633 = scalar_lea.vmem %s12, %s632
        %p634 = pneg %p390
        %p635 = pneg %p387
        %p636 = scmp.lt.s32.totalorder %s31, 1
        %s637 = scalar_select %p636, %s31, 1
        %s638 = smul.addr %s637, 2
        %s639 = scalar_lea.vmem %s13, %s638
        %p640 = scmp.lt.s32.totalorder %s31, 1
        %s641 = scalar_select %p640, %s31, 1
        %s642 = smul.addr %s641, 2
        %s643 = smul.addr %s642, 8
        %s644 = scalar_lea.vmem %s0, %s643
        %p645 = scmp.lt.s32.totalorder %s31, 1
        %s646 = scalar_select %p645, %s31, 1
        %s647 = smul.addr %s646, 2
        %s648 = smul.addr %s647, 4
        %s649 = scalar_lea.vmem %s1, %s648
        %p650 = scmp.lt.s32.totalorder %s31, 1
        %s651 = scalar_select %p650, %s31, 1
        %s652 = smul.addr %s651, 2
        %s653 = smul.addr %s652, 4
        %s654 = scalar_lea.vmem %s2, %s653
        %p655 = scmp.lt.s32.totalorder %s31, 1
        %s656 = scalar_select %p655, %s31, 1
        %s657 = smul.addr %s656, 2
        %s658 = smul.addr %s657, 4
        %s659 = scalar_lea.vmem %s3, %s658
        %p660 = scmp.lt.s32.totalorder %s31, 1
        %s661 = scalar_select %p660, %s31, 1
        %s662 = smul.addr %s661, 2
        %s663 = smul.addr %s662, 8
        %s664 = scalar_lea.vmem %s4, %s663
        %p665 = scmp.lt.s32.totalorder %s31, 1
        %s666 = scalar_select %p665, %s31, 1
        %s667 = smul.addr %s666, 2
        %s668 = smul.addr %s667, 8
        %s669 = scalar_lea.vmem %s5, %s668
        %p670 = scmp.lt.s32.totalorder %s31, 1
        %s671 = scalar_select %p670, %s31, 1
        %s672 = smul.addr %s671, 2
        %s673 = smul.addr %s672, 4
        %s674 = scalar_lea.vmem %s8, %s673
        %p675 = scmp.lt.s32.totalorder %s31, 1
        %s676 = scalar_select %p675, %s31, 1
        %s677 = smul.addr %s676, 4
        %s678 = smul.addr %s677, 8
        %s679 = scalar_lea.vmem %s9, %s678
        %p680 = scmp.lt.s32.totalorder %s31, 1
        %s681 = scalar_select %p680, %s31, 1
        %s682 = smul.addr %s681, 2
        %s683 = smul.addr %s682, 8
        %s684 = scalar_lea.vmem %s10, %s683
        %p685 = scmp.lt.s32.totalorder %s31, 1
        %s686 = scalar_select %p685, %s31, 1
        %s687 = smul.addr %s686, 4
        %s688 = smul.addr %s687, 8
        %s689 = scalar_lea.vmem %s11, %s688
        %p690 = scmp.lt.s32.totalorder %s31, 1
        %s691 = scalar_select %p690, %s31, 1
        %s692 = smul.addr %s691, 2
        %s693 = scalar_lea.vmem %s12, %s692
        %p694 = scmp.lt.s32.totalorder %s31, 1
        %s695 = scalar_select %p694, %s31, 1
        %s696 = smul.addr %s695, 2
        %s697 = scalar_lea.vmem %s13, %s696
        %v698 = vld [vmem:[%s644] sm:$0xff]
        %v699 = vld [vmem:[%s644 + $0x8] sm:$0xff]
        %v700 = vld [vmem:[%s669] sm:$0xff]
        %v701 = vld [vmem:[%s649] sm:$0xf]
        %v702 = vperm.slane %v700, 0
        %vm703 = vcmask 31744
        %v705 = vsel %vm703, %v698, 0
        %v708 = vsel %vm703, %v699, 0
        %vm710 = vcmask 1043456
        %v712 = vsel %vm710, %v701, 0
        %714 = vmatpush.msra.mxu0 0.0
        %715 = vmatpush.msra.mxu0 0.0
        %716 = vmatpush.msra.mxu0 0.0
        %717 = vmatpush.msra.mxu0 0.0
        %718 = vmatpush.msra.mxu0 0.0
        %719 = vmatpush.msra.mxu0 0.0
        %720 = vmatpush.msra.mxu0 0.0
        %721 = vmatpush.msra.mxu0 0.0
        %722 = vmatpush.msra.mxu0 0.0
        %723 = vmatpush.msra.mxu0 0.0
        %724 = vmatpush.msra.mxu0 0.0
        %725 = vmatpush.msra.mxu0 0.0
        %726 = vmatpush.msra.mxu0 0.0
        %727 = vmatpush.msra.mxu0 0.0
        %728 = vmatpush.msra.mxu0 0.0
        %729 = vmatpush.msra.mxu0 %v712
        %730 = vmatmul.f32.gmra.mxu0 %v705
        %v731 = vpop.f32.mrf.mxu0
        %v732 = vadd.f32 %v702, %v731
        %733 = vmatmul.f32.gmra.mxu0 %v708
        %v734 = vpop.f32.mrf.mxu0
        %v735 = vadd.f32 %v702, %v734
        %736 = vdwg.mxu0
        %738 = vrot.lane.b32.xlu0 %v732, 124
        %v739 = vpop.permute.xlu0 %738
        %v740 = vsel %vm703, %v732, 0
        %v742 = vsel %vm703, %v739, 0
        %744 = vmatpush.xpose.msra.mxu0 0.0
        %745 = vmatpush.xpose.msra.mxu0 0.0
        %746 = vmatpush.xpose.msra.mxu0 0.0
        %747 = vmatpush.xpose.msra.mxu0 0.0
        %748 = vmatpush.xpose.msra.mxu0 0.0
        %749 = vmatpush.xpose.msra.mxu0 0.0
        %750 = vmatpush.xpose.msra.mxu0 0.0
        %751 = vmatpush.xpose.msra.mxu0 0.0
        %752 = vmatpush.xpose.msra.mxu0 0.0
        %753 = vmatpush.xpose.msra.mxu0 0.0
        %754 = vmatpush.xpose.msra.mxu0 0.0
        %755 = vmatpush.xpose.msra.mxu0 0.0
        %756 = vmatpush.xpose.msra.mxu0 0.0
        %757 = vmatpush.xpose.msra.mxu0 0.0
        %758 = vmatpush.xpose.msra.mxu0 0.0
        %759 = vmatpush.xpose.msra.mxu0 %v742
        %760 = vmatmul.f32.gmra.mxu0 %v740
        %v761 = vpop.f32.mrf.mxu0
        %v762 = vadd.f32 0.0, %v761
        %763 = vdwg.mxu0
        %vm764 = vcmask 64512
        %v765 = vsel %vm764, %v762, -inf
        %766 = vmax.xlane.f32.xlu0 %v765
        %v767 = vpop.xlane.xlu0 %766
        %v768 = vsub.f32 %v762, %v767
        %v769 = vmul.f32 %v768, 1.442695
        %v770 = vpow.pop %v769
        %v771 = vsel %vm764, %v770, 0.0
        %772 = vadd.xlane.f32.xlu0 %v771
        %v773 = vpop.xlane.xlu0 %772
        %v774 = vrcp.pop %v773
        %v775 = vmul.f32 %v773, %v774
        %v776 = vsub.f32 1.0, %v775
        %v777 = vmul.f32 %v774, %v776
        %v778 = vadd.f32 %v774, %v777
        %vm779 = vweird.f32 %v773
        %vm780 = vweird.f32 %v774
        %vm781 = vmor %vm779, %vm780
        %v782 = vsel %vm781, %v774, %v778
        %v783 = vand.u32 2147483647, %v773
        %vm784 = vcmp.eq.f32.partialorder %v783, 8.507059e+37
        %v785 = vand.u32 %v773, 2147483648
        %v786 = vor.u32 1.1754944e-38, %v785
        %v787 = vsel %vm784, %v786, %v782
        %v788 = vmul.f32 %v770, %v787
        %789 = vrot.lane.b32.xlu0 %v732, 120
        %v790 = vpop.permute.xlu0 %789
        %792 = vrot.lane.b32.xlu0 %v698, 4
        %v793 = vpop.permute.xlu0 %792
        %v795 = vsel %vm703, %v790, %v793
        %v797 = vsel %vm764, %v788, 0
        %799 = vmatpush.msra.mxu0 0.0
        %800 = vmatpush.msra.mxu0 0.0
        %801 = vmatpush.msra.mxu0 0.0
        %802 = vmatpush.msra.mxu0 0.0
        %803 = vmatpush.msra.mxu0 0.0
        %804 = vmatpush.msra.mxu0 0.0
        %805 = vmatpush.msra.mxu0 0.0
        %806 = vmatpush.msra.mxu0 0.0
        %807 = vmatpush.msra.mxu0 0.0
        %808 = vmatpush.msra.mxu0 0.0
        %809 = vmatpush.msra.mxu0 0.0
        %810 = vmatpush.msra.mxu0 0.0
        %811 = vmatpush.msra.mxu0 0.0
        %812 = vmatpush.msra.mxu0 0.0
        %813 = vmatpush.msra.mxu0 0.0
        %814 = vmatpush.msra.mxu0 %v795
        %815 = vmatmul.f32.gmra.mxu0 %v797
        %v816 = vpop.f32.mrf.mxu0
        %v817 = vadd.f32 0.0, %v816
        %818 = vdwg.mxu0
        %820 = vrot.lane.b32.xlu0 %v735, 124
        %v821 = vpop.permute.xlu0 %820
        %v822 = vsel %vm703, %v735, 0
        %v824 = vsel %vm703, %v821, 0
        %826 = vmatpush.xpose.msra.mxu0 0.0
        %827 = vmatpush.xpose.msra.mxu0 0.0
        %828 = vmatpush.xpose.msra.mxu0 0.0
        %829 = vmatpush.xpose.msra.mxu0 0.0
        %830 = vmatpush.xpose.msra.mxu0 0.0
        %831 = vmatpush.xpose.msra.mxu0 0.0
        %832 = vmatpush.xpose.msra.mxu0 0.0
        %833 = vmatpush.xpose.msra.mxu0 0.0
        %834 = vmatpush.xpose.msra.mxu0 0.0
        %835 = vmatpush.xpose.msra.mxu0 0.0
        %836 = vmatpush.xpose.msra.mxu0 0.0
        %837 = vmatpush.xpose.msra.mxu0 0.0
        %838 = vmatpush.xpose.msra.mxu0 0.0
        %839 = vmatpush.xpose.msra.mxu0 0.0
        %840 = vmatpush.xpose.msra.mxu0 0.0
        %841 = vmatpush.xpose.msra.mxu0 %v824
        %842 = vmatmul.f32.gmra.mxu0 %v822
        %v843 = vpop.f32.mrf.mxu0
        %v844 = vadd.f32 0.0, %v843
        %845 = vdwg.mxu0
        %v846 = vsel %vm764, %v844, -inf
        %847 = vmax.xlane.f32.xlu0 %v846
        %v848 = vpop.xlane.xlu0 %847
        %v849 = vsub.f32 %v844, %v848
        %v850 = vmul.f32 %v849, 1.442695
        %v851 = vpow.pop %v850
        %v852 = vsel %vm764, %v851, 0.0
        %853 = vadd.xlane.f32.xlu0 %v852
        %v854 = vpop.xlane.xlu0 %853
        %v855 = vrcp.pop %v854
        %v856 = vmul.f32 %v854, %v855
        %v857 = vsub.f32 1.0, %v856
        %v858 = vmul.f32 %v855, %v857
        %v859 = vadd.f32 %v855, %v858
        %vm860 = vweird.f32 %v854
        %vm861 = vweird.f32 %v855
        %vm862 = vmor %vm860, %vm861
        %v863 = vsel %vm862, %v855, %v859
        %v864 = vand.u32 2147483647, %v854
        %vm865 = vcmp.eq.f32.partialorder %v864, 8.507059e+37
        %v866 = vand.u32 %v854, 2147483648
        %v867 = vor.u32 1.1754944e-38, %v866
        %v868 = vsel %vm865, %v867, %v863
        %v869 = vmul.f32 %v851, %v868
        %870 = vrot.lane.b32.xlu0 %v735, 120
        %v871 = vpop.permute.xlu0 %870
        %873 = vrot.lane.b32.xlu0 %v699, 4
        %v874 = vpop.permute.xlu0 %873
        %v876 = vsel %vm703, %v871, %v874
        %v878 = vsel %vm764, %v869, 0
        %880 = vmatpush.msra.mxu0 0.0
        %881 = vmatpush.msra.mxu0 0.0
        %882 = vmatpush.msra.mxu0 0.0
        %883 = vmatpush.msra.mxu0 0.0
        %884 = vmatpush.msra.mxu0 0.0
        %885 = vmatpush.msra.mxu0 0.0
        %886 = vmatpush.msra.mxu0 0.0
        %887 = vmatpush.msra.mxu0 0.0
        %888 = vmatpush.msra.mxu0 0.0
        %889 = vmatpush.msra.mxu0 0.0
        %890 = vmatpush.msra.mxu0 0.0
        %891 = vmatpush.msra.mxu0 0.0
        %892 = vmatpush.msra.mxu0 0.0
        %893 = vmatpush.msra.mxu0 0.0
        %894 = vmatpush.msra.mxu0 0.0
        %895 = vmatpush.msra.mxu0 %v876
        %896 = vmatmul.f32.gmra.mxu0 %v878
        %v897 = vpop.f32.mrf.mxu0
        %v898 = vadd.f32 0.0, %v897
        %899 = vdwg.mxu0
        %902 = vrot.lane.b32.xlu0 %v817, 124
        %v903 = vpop.permute.xlu0 %902
        %904 = vrot.lane.b32.xlu0 %v898, 124
        %v905 = vpop.permute.xlu0 %904
        %908 = vst.msk [vmem:[%s689] sm:$0xff] %vm703, %v903
        %909 = vst.msk [vmem:[%s689 + $0x8] sm:$0xff] %vm703, %v905
        %v910 = vld [vmem:[%s654] sm:$0xf]
        %v911 = vperm.slane %v700, 1
        %v912 = vsel %vm703, %v817, 0
        %v914 = vsel %vm703, %v898, 0
        %v917 = vsel %vm710, %v910, 0
        %919 = vmatpush.msra.mxu0 0.0
        %920 = vmatpush.msra.mxu0 0.0
        %921 = vmatpush.msra.mxu0 0.0
        %922 = vmatpush.msra.mxu0 0.0
        %923 = vmatpush.msra.mxu0 0.0
        %924 = vmatpush.msra.mxu0 0.0
        %925 = vmatpush.msra.mxu0 0.0
        %926 = vmatpush.msra.mxu0 0.0
        %927 = vmatpush.msra.mxu0 0.0
        %928 = vmatpush.msra.mxu0 0.0
        %929 = vmatpush.msra.mxu0 0.0
        %930 = vmatpush.msra.mxu0 0.0
        %931 = vmatpush.msra.mxu0 0.0
        %932 = vmatpush.msra.mxu0 0.0
        %933 = vmatpush.msra.mxu0 0.0
        %934 = vmatpush.msra.mxu0 %v917
        %935 = vmatmul.f32.gmra.mxu0 %v912
        %v936 = vpop.f32.mrf.mxu0
        %v937 = vadd.f32 %v911, %v936
        %938 = vmatmul.f32.gmra.mxu0 %v914
        %v939 = vpop.f32.mrf.mxu0
        %v940 = vadd.f32 %v911, %v939
        %941 = vdwg.mxu0
        %v942 = vadd.f32 %v698, %v937
        %v943 = vadd.f32 %v699, %v940
        %v944 = vsel %vm703, %v942, 0.0
        %945 = vadd.xlane.f32.xlu0 %v944
        %v946 = vpop.xlane.xlu0 %945
        %v947 = vsel %vm703, %v943, 0.0
        %948 = vadd.xlane.f32.xlu0 %v947
        %v949 = vpop.xlane.xlu0 %948
        %v950 = vrcp.pop 4.0
        %v951 = vmul.f32 4.0, %v950
        %v952 = vsub.f32 1.0, %v951
        %v953 = vmul.f32 %v950, %v952
        %v954 = vadd.f32 %v950, %v953
        %vm955 = vweird.f32 %v950
        %v956 = vsel %vm955, %v950, %v954
        %v957 = vmul.f32 %v946, %v956
        %v958 = vmul.f32 %v949, %v956
        %v959 = vsub.f32 %v942, %v957
        %v960 = vsub.f32 %v943, %v958
        %v961 = vmul.f32 %v959, %v959
        %v962 = vmul.f32 %v960, %v960
        %v963 = vsel %vm703, %v961, 0.0
        %964 = vadd.xlane.f32.xlu0 %v963
        %v965 = vpop.xlane.xlu0 %964
        %v966 = vsel %vm703, %v962, 0.0
        %967 = vadd.xlane.f32.xlu0 %v966
        %v968 = vpop.xlane.xlu0 %967
        %v969 = vmul.f32 %v965, %v956
        %v970 = vmul.f32 %v968, %v956
        %v971 = vadd.f32 %v969, 1e-05
        %v972 = vadd.f32 %v970, 1e-05
        %v973 = vrsqrt.pop %v971
        %v974 = vmul.f32 %v973, %v971
        %v975 = vmul.f32 %v974, %v973
        %v976 = vmul.f32 0.5, %v975
        %v977 = vsub.f32 1.5, %v976
        %v978 = vmul.f32 %v973, %v977
        %vm979 = vweird.f32 %v971
        %vm980 = vweird.f32 %v973
        %vm981 = vmor %vm979, %vm980
        %v982 = vsel %vm981, %v973, %v978
        %v983 = vrsqrt.pop %v972
        %v984 = vmul.f32 %v983, %v972
        %v985 = vmul.f32 %v984, %v983
        %v986 = vmul.f32 0.5, %v985
        %v987 = vsub.f32 1.5, %v986
        %v988 = vmul.f32 %v983, %v987
        %vm989 = vweird.f32 %v972
        %vm990 = vweird.f32 %v983
        %vm991 = vmor %vm989, %vm990
        %v992 = vsel %vm991, %v983, %v988
        %v993 = vmul.f32 %v959, %v982
        %v994 = vmul.f32 %v960, %v992
        %v995 = vperm.slane %v700, 4
        %v996 = vmul.f32 %v993, %v995
        %v997 = vmul.f32 %v994, %v995
        %v998 = vperm.slane %v700, 5
        %v999 = vadd.f32 %v996, %v998
        %v1000 = vadd.f32 %v997, %v998
        %v1001 = vld [vmem:[%s659] sm:$0xf]
        %v1002 = vperm.slane %v700, 2
        %v1004 = vsel %vm703, %v999, 0
        %v1007 = vsel %vm703, %v1000, 0
        %v1010 = vsel %vm710, %v1001, 0
        %1012 = vmatpush.msra.mxu0 0.0
        %1013 = vmatpush.msra.mxu0 0.0
        %1014 = vmatpush.msra.mxu0 0.0
        %1015 = vmatpush.msra.mxu0 0.0
        %1016 = vmatpush.msra.mxu0 0.0
        %1017 = vmatpush.msra.mxu0 0.0
        %1018 = vmatpush.msra.mxu0 0.0
        %1019 = vmatpush.msra.mxu0 0.0
        %1020 = vmatpush.msra.mxu0 0.0
        %1021 = vmatpush.msra.mxu0 0.0
        %1022 = vmatpush.msra.mxu0 0.0
        %1023 = vmatpush.msra.mxu0 0.0
        %1024 = vmatpush.msra.mxu0 0.0
        %1025 = vmatpush.msra.mxu0 0.0
        %1026 = vmatpush.msra.mxu0 0.0
        %1027 = vmatpush.msra.mxu0 %v1010
        %1028 = vmatmul.f32.gmra.mxu0 %v1004
        %v1029 = vpop.f32.mrf.mxu0
        %v1030 = vadd.f32 %v1002, %v1029
        %1031 = vmatmul.f32.gmra.mxu0 %v1007
        %v1032 = vpop.f32.mrf.mxu0
        %v1033 = vadd.f32 %v1002, %v1032
        %1034 = vdwg.mxu0
        %v1035 = vmax.f32 %v1030, 0.0
        %v1036 = vmax.f32 %v1033, 0.0
        %v1037 = vld [vmem:[%s664] sm:$0xff]
        %v1038 = vperm.slane %v700, 3
        %v1040 = vsel %vm764, %v1035, 0
        %v1043 = vsel %vm764, %v1036, 0
        %1045 = vmatpush.msra.mxu0 0.0
        %1046 = vmatpush.msra.mxu0 0.0
        %1047 = vmatpush.msra.mxu0 0.0
        %1048 = vmatpush.msra.mxu0 0.0
        %1049 = vmatpush.msra.mxu0 0.0
        %1050 = vmatpush.msra.mxu0 0.0
        %1051 = vmatpush.msra.mxu0 0.0
        %1052 = vmatpush.msra.mxu0 0.0
        %1053 = vmatpush.msra.mxu0 0.0
        %1054 = vmatpush.msra.mxu0 0.0
        %1055 = vmatpush.msra.mxu0 0.0
        %1056 = vmatpush.msra.mxu0 0.0
        %1057 = vmatpush.msra.mxu0 0.0
        %1058 = vmatpush.msra.mxu0 0.0
        %1059 = vmatpush.msra.mxu0 0.0
        %1060 = vmatpush.msra.mxu0 %v1037
        %1061 = vmatmul.f32.gmra.mxu0 %v1040
        %v1062 = vpop.f32.mrf.mxu0
        %v1063 = vadd.f32 %v1038, %v1062
        %1064 = vmatmul.f32.gmra.mxu0 %v1043
        %v1065 = vpop.f32.mrf.mxu0
        %v1066 = vadd.f32 %v1038, %v1065
        %1067 = vdwg.mxu0
        %v1068 = vadd.f32 %v999, %v1063
        %v1069 = vadd.f32 %v1000, %v1066
        %v1070 = vsel %vm703, %v1068, 0.0
        %1071 = vadd.xlane.f32.xlu0 %v1070
        %v1072 = vpop.xlane.xlu0 %1071
        %v1073 = vsel %vm703, %v1069, 0.0
        %1074 = vadd.xlane.f32.xlu0 %v1073
        %v1075 = vpop.xlane.xlu0 %1074
        %v1076 = vmul.f32 %v1072, %v956
        %v1077 = vmul.f32 %v1075, %v956
        %v1078 = vsub.f32 %v1068, %v1076
        %v1079 = vsub.f32 %v1069, %v1077
        %v1080 = vmul.f32 %v1078, %v1078
        %v1081 = vmul.f32 %v1079, %v1079
        %v1082 = vsel %vm703, %v1080, 0.0
        %1083 = vadd.xlane.f32.xlu0 %v1082
        %v1084 = vpop.xlane.xlu0 %1083
        %v1085 = vsel %vm703, %v1081, 0.0
        %1086 = vadd.xlane.f32.xlu0 %v1085
        %v1087 = vpop.xlane.xlu0 %1086
        %v1088 = vmul.f32 %v1084, %v956
        %v1089 = vmul.f32 %v1087, %v956
        %v1090 = vadd.f32 %v1088, 1e-05
        %v1091 = vadd.f32 %v1089, 1e-05
        %v1092 = vrsqrt.pop %v1090
        %v1093 = vmul.f32 %v1092, %v1090
        %v1094 = vmul.f32 %v1093, %v1092
        %v1095 = vmul.f32 0.5, %v1094
        %v1096 = vsub.f32 1.5, %v1095
        %v1097 = vmul.f32 %v1092, %v1096
        %vm1098 = vweird.f32 %v1090
        %vm1099 = vweird.f32 %v1092
        %vm1100 = vmor %vm1098, %vm1099
        %v1101 = vsel %vm1100, %v1092, %v1097
        %v1102 = vrsqrt.pop %v1091
        %v1103 = vmul.f32 %v1102, %v1091
        %v1104 = vmul.f32 %v1103, %v1102
        %v1105 = vmul.f32 0.5, %v1104
        %v1106 = vsub.f32 1.5, %v1105
        %v1107 = vmul.f32 %v1102, %v1106
        %vm1108 = vweird.f32 %v1091
        %vm1109 = vweird.f32 %v1102
        %vm1110 = vmor %vm1108, %vm1109
        %v1111 = vsel %vm1110, %v1102, %v1107
        %v1112 = vmul.f32 %v1078, %v1101
        %v1113 = vmul.f32 %v1079, %v1111
        %v1114 = vperm.slane %v700, 6
        %v1115 = vmul.f32 %v1112, %v1114
        %v1116 = vmul.f32 %v1113, %v1114
        %v1117 = vperm.slane %v700, 7
        %v1118 = vadd.f32 %v1115, %v1117
        %v1119 = vadd.f32 %v1116, %v1117
        %s1120 = scalar_lea.vmem %s669, 8
        %v1121 = vld [vmem:[%s1120] sm:$0xff]
        %s1122 = scalar_lea.vmem %s649, 4
        %v1123 = vld [vmem:[%s1122] sm:$0xf]
        %v1124 = vperm.slane %v1121, 0
        %v1126 = vsel %vm703, %v1118, 0
        %v1129 = vsel %vm703, %v1119, 0
        %v1132 = vsel %vm710, %v1123, 0
        %1134 = vmatpush.msra.mxu0 0.0
        %1135 = vmatpush.msra.mxu0 0.0
        %1136 = vmatpush.msra.mxu0 0.0
        %1137 = vmatpush.msra.mxu0 0.0
        %1138 = vmatpush.msra.mxu0 0.0
        %1139 = vmatpush.msra.mxu0 0.0
        %1140 = vmatpush.msra.mxu0 0.0
        %1141 = vmatpush.msra.mxu0 0.0
        %1142 = vmatpush.msra.mxu0 0.0
        %1143 = vmatpush.msra.mxu0 0.0
        %1144 = vmatpush.msra.mxu0 0.0
        %1145 = vmatpush.msra.mxu0 0.0
        %1146 = vmatpush.msra.mxu0 0.0
        %1147 = vmatpush.msra.mxu0 0.0
        %1148 = vmatpush.msra.mxu0 0.0
        %1149 = vmatpush.msra.mxu0 %v1132
        %1150 = vmatmul.f32.gmra.mxu0 %v1126
        %v1151 = vpop.f32.mrf.mxu0
        %v1152 = vadd.f32 %v1124, %v1151
        %1153 = vmatmul.f32.gmra.mxu0 %v1129
        %v1154 = vpop.f32.mrf.mxu0
        %v1155 = vadd.f32 %v1124, %v1154
        %1156 = vdwg.mxu0
        %1158 = vrot.lane.b32.xlu0 %v1152, 124
        %v1159 = vpop.permute.xlu0 %1158
        %v1160 = vsel %vm703, %v1152, 0
        %v1162 = vsel %vm703, %v1159, 0
        %1164 = vmatpush.xpose.msra.mxu0 0.0
        %1165 = vmatpush.xpose.msra.mxu0 0.0
        %1166 = vmatpush.xpose.msra.mxu0 0.0
        %1167 = vmatpush.xpose.msra.mxu0 0.0
        %1168 = vmatpush.xpose.msra.mxu0 0.0
        %1169 = vmatpush.xpose.msra.mxu0 0.0
        %1170 = vmatpush.xpose.msra.mxu0 0.0
        %1171 = vmatpush.xpose.msra.mxu0 0.0
        %1172 = vmatpush.xpose.msra.mxu0 0.0
        %1173 = vmatpush.xpose.msra.mxu0 0.0
        %1174 = vmatpush.xpose.msra.mxu0 0.0
        %1175 = vmatpush.xpose.msra.mxu0 0.0
        %1176 = vmatpush.xpose.msra.mxu0 0.0
        %1177 = vmatpush.xpose.msra.mxu0 0.0
        %1178 = vmatpush.xpose.msra.mxu0 0.0
        %1179 = vmatpush.xpose.msra.mxu0 %v1162
        %1180 = vmatmul.f32.gmra.mxu0 %v1160
        %v1181 = vpop.f32.mrf.mxu0
        %v1182 = vadd.f32 0.0, %v1181
        %1183 = vdwg.mxu0
        %v1184 = vsel %vm764, %v1182, -inf
        %1185 = vmax.xlane.f32.xlu0 %v1184
        %v1186 = vpop.xlane.xlu0 %1185
        %v1187 = vsub.f32 %v1182, %v1186
        %v1188 = vmul.f32 %v1187, 1.442695
        %v1189 = vpow.pop %v1188
        %v1190 = vsel %vm764, %v1189, 0.0
        %1191 = vadd.xlane.f32.xlu0 %v1190
        %v1192 = vpop.xlane.xlu0 %1191
        %v1193 = vrcp.pop %v1192
        %v1194 = vmul.f32 %v1192, %v1193
        %v1195 = vsub.f32 1.0, %v1194
        %v1196 = vmul.f32 %v1193, %v1195
        %v1197 = vadd.f32 %v1193, %v1196
        %vm1198 = vweird.f32 %v1192
        %vm1199 = vweird.f32 %v1193
        %vm1200 = vmor %vm1198, %vm1199
        %v1201 = vsel %vm1200, %v1193, %v1197
        %v1202 = vand.u32 2147483647, %v1192
        %vm1203 = vcmp.eq.f32.partialorder %v1202, 8.507059e+37
        %v1204 = vand.u32 %v1192, 2147483648
        %v1205 = vor.u32 1.1754944e-38, %v1204
        %v1206 = vsel %vm1203, %v1205, %v1201
        %v1207 = vmul.f32 %v1189, %v1206
        %1208 = vrot.lane.b32.xlu0 %v1152, 120
        %v1209 = vpop.permute.xlu0 %1208
        %v1211 = vsel %vm703, %v1209, %v793
        %v1213 = vsel %vm764, %v1207, 0
        %1215 = vmatpush.msra.mxu0 0.0
        %1216 = vmatpush.msra.mxu0 0.0
        %1217 = vmatpush.msra.mxu0 0.0
        %1218 = vmatpush.msra.mxu0 0.0
        %1219 = vmatpush.msra.mxu0 0.0
        %1220 = vmatpush.msra.mxu0 0.0
        %1221 = vmatpush.msra.mxu0 0.0
        %1222 = vmatpush.msra.mxu0 0.0
        %1223 = vmatpush.msra.mxu0 0.0
        %1224 = vmatpush.msra.mxu0 0.0
        %1225 = vmatpush.msra.mxu0 0.0
        %1226 = vmatpush.msra.mxu0 0.0
        %1227 = vmatpush.msra.mxu0 0.0
        %1228 = vmatpush.msra.mxu0 0.0
        %1229 = vmatpush.msra.mxu0 0.0
        %1230 = vmatpush.msra.mxu0 %v1211
        %1231 = vmatmul.f32.gmra.mxu0 %v1213
        %v1232 = vpop.f32.mrf.mxu0
        %v1233 = vadd.f32 0.0, %v1232
        %1234 = vdwg.mxu0
        %1236 = vrot.lane.b32.xlu0 %v1155, 124
        %v1237 = vpop.permute.xlu0 %1236
        %v1238 = vsel %vm703, %v1155, 0
        %v1240 = vsel %vm703, %v1237, 0
        %1242 = vmatpush.xpose.msra.mxu0 0.0
        %1243 = vmatpush.xpose.msra.mxu0 0.0
        %1244 = vmatpush.xpose.msra.mxu0 0.0
        %1245 = vmatpush.xpose.msra.mxu0 0.0
        %1246 = vmatpush.xpose.msra.mxu0 0.0
        %1247 = vmatpush.xpose.msra.mxu0 0.0
        %1248 = vmatpush.xpose.msra.mxu0 0.0
        %1249 = vmatpush.xpose.msra.mxu0 0.0
        %1250 = vmatpush.xpose.msra.mxu0 0.0
        %1251 = vmatpush.xpose.msra.mxu0 0.0
        %1252 = vmatpush.xpose.msra.mxu0 0.0
        %1253 = vmatpush.xpose.msra.mxu0 0.0
        %1254 = vmatpush.xpose.msra.mxu0 0.0
        %1255 = vmatpush.xpose.msra.mxu0 0.0
        %1256 = vmatpush.xpose.msra.mxu0 0.0
        %1257 = vmatpush.xpose.msra.mxu0 %v1240
        %1258 = vmatmul.f32.gmra.mxu0 %v1238
        %v1259 = vpop.f32.mrf.mxu0
        %v1260 = vadd.f32 0.0, %v1259
        %1261 = vdwg.mxu0
        %v1262 = vsel %vm764, %v1260, -inf
        %1263 = vmax.xlane.f32.xlu0 %v1262
        %v1264 = vpop.xlane.xlu0 %1263
        %v1265 = vsub.f32 %v1260, %v1264
        %v1266 = vmul.f32 %v1265, 1.442695
        %v1267 = vpow.pop %v1266
        %v1268 = vsel %vm764, %v1267, 0.0
        %1269 = vadd.xlane.f32.xlu0 %v1268
        %v1270 = vpop.xlane.xlu0 %1269
        %v1271 = vrcp.pop %v1270
        %v1272 = vmul.f32 %v1270, %v1271
        %v1273 = vsub.f32 1.0, %v1272
        %v1274 = vmul.f32 %v1271, %v1273
        %v1275 = vadd.f32 %v1271, %v1274
        %vm1276 = vweird.f32 %v1270
        %vm1277 = vweird.f32 %v1271
        %vm1278 = vmor %vm1276, %vm1277
        %v1279 = vsel %vm1278, %v1271, %v1275
        %v1280 = vand.u32 2147483647, %v1270
        %vm1281 = vcmp.eq.f32.partialorder %v1280, 8.507059e+37
        %v1282 = vand.u32 %v1270, 2147483648
        %v1283 = vor.u32 1.1754944e-38, %v1282
        %v1284 = vsel %vm1281, %v1283, %v1279
        %v1285 = vmul.f32 %v1267, %v1284
        %1286 = vrot.lane.b32.xlu0 %v1155, 120
        %v1287 = vpop.permute.xlu0 %1286
        %v1289 = vsel %vm703, %v1287, %v874
        %v1291 = vsel %vm764, %v1285, 0
        %1293 = vmatpush.msra.mxu0 0.0
        %1294 = vmatpush.msra.mxu0 0.0
        %1295 = vmatpush.msra.mxu0 0.0
        %1296 = vmatpush.msra.mxu0 0.0
        %1297 = vmatpush.msra.mxu0 0.0
        %1298 = vmatpush.msra.mxu0 0.0
        %1299 = vmatpush.msra.mxu0 0.0
        %1300 = vmatpush.msra.mxu0 0.0
        %1301 = vmatpush.msra.mxu0 0.0
        %1302 = vmatpush.msra.mxu0 0.0
        %1303 = vmatpush.msra.mxu0 0.0
        %1304 = vmatpush.msra.mxu0 0.0
        %1305 = vmatpush.msra.mxu0 0.0
        %1306 = vmatpush.msra.mxu0 0.0
        %1307 = vmatpush.msra.mxu0 0.0
        %1308 = vmatpush.msra.mxu0 %v1289
        %1309 = vmatmul.f32.gmra.mxu0 %v1291
        %v1310 = vpop.f32.mrf.mxu0
        %v1311 = vadd.f32 0.0, %v1310
        %1312 = vdwg.mxu0
        %1315 = vrot.lane.b32.xlu0 %v1233, 124
        %v1316 = vpop.permute.xlu0 %1315
        %1317 = vrot.lane.b32.xlu0 %v1311, 124
        %v1318 = vpop.permute.xlu0 %1317
        %s1321 = scalar_lea.vmem %s689, 16
        %1322 = vst.msk [vmem:[%s1321] sm:$0xff] %vm703, %v1316
        %1323 = vst.msk [vmem:[%s1321 + $0x8] sm:$0xff] %vm703, %v1318
        %s1324 = scalar_lea.vmem %s654, 4
        %v1325 = vld [vmem:[%s1324] sm:$0xf]
        %v1326 = vperm.slane %v1121, 1
        %v1327 = vsel %vm703, %v1233, 0
        %v1329 = vsel %vm703, %v1311, 0
        %v1332 = vsel %vm710, %v1325, 0
        %1334 = vmatpush.msra.mxu0 0.0
        %1335 = vmatpush.msra.mxu0 0.0
        %1336 = vmatpush.msra.mxu0 0.0
        %1337 = vmatpush.msra.mxu0 0.0
        %1338 = vmatpush.msra.mxu0 0.0
        %1339 = vmatpush.msra.mxu0 0.0
        %1340 = vmatpush.msra.mxu0 0.0
        %1341 = vmatpush.msra.mxu0 0.0
        %1342 = vmatpush.msra.mxu0 0.0
        %1343 = vmatpush.msra.mxu0 0.0
        %1344 = vmatpush.msra.mxu0 0.0
        %1345 = vmatpush.msra.mxu0 0.0
        %1346 = vmatpush.msra.mxu0 0.0
        %1347 = vmatpush.msra.mxu0 0.0
        %1348 = vmatpush.msra.mxu0 0.0
        %1349 = vmatpush.msra.mxu0 %v1332
        %1350 = vmatmul.f32.gmra.mxu0 %v1327
        %v1351 = vpop.f32.mrf.mxu0
        %v1352 = vadd.f32 %v1326, %v1351
        %1353 = vmatmul.f32.gmra.mxu0 %v1329
        %v1354 = vpop.f32.mrf.mxu0
        %v1355 = vadd.f32 %v1326, %v1354
        %1356 = vdwg.mxu0
        %v1357 = vadd.f32 %v1118, %v1352
        %v1358 = vadd.f32 %v1119, %v1355
        %v1359 = vsel %vm703, %v1357, 0.0
        %1360 = vadd.xlane.f32.xlu0 %v1359
        %v1361 = vpop.xlane.xlu0 %1360
        %v1362 = vsel %vm703, %v1358, 0.0
        %1363 = vadd.xlane.f32.xlu0 %v1362
        %v1364 = vpop.xlane.xlu0 %1363
        %v1365 = vmul.f32 %v1361, %v956
        %v1366 = vmul.f32 %v1364, %v956
        %v1367 = vsub.f32 %v1357, %v1365
        %v1368 = vsub.f32 %v1358, %v1366
        %v1369 = vmul.f32 %v1367, %v1367
        %v1370 = vmul.f32 %v1368, %v1368
        %v1371 = vsel %vm703, %v1369, 0.0
        %1372 = vadd.xlane.f32.xlu0 %v1371
        %v1373 = vpop.xlane.xlu0 %1372
        %v1374 = vsel %vm703, %v1370, 0.0
        %1375 = vadd.xlane.f32.xlu0 %v1374
        %v1376 = vpop.xlane.xlu0 %1375
        %v1377 = vmul.f32 %v1373, %v956
        %v1378 = vmul.f32 %v1376, %v956
        %v1379 = vadd.f32 %v1377, 1e-05
        %v1380 = vadd.f32 %v1378, 1e-05
        %v1381 = vrsqrt.pop %v1379
        %v1382 = vmul.f32 %v1381, %v1379
        %v1383 = vmul.f32 %v1382, %v1381
        %v1384 = vmul.f32 0.5, %v1383
        %v1385 = vsub.f32 1.5, %v1384
        %v1386 = vmul.f32 %v1381, %v1385
        %vm1387 = vweird.f32 %v1379
        %vm1388 = vweird.f32 %v1381
        %vm1389 = vmor %vm1387, %vm1388
        %v1390 = vsel %vm1389, %v1381, %v1386
        %v1391 = vrsqrt.pop %v1380
        %v1392 = vmul.f32 %v1391, %v1380
        %v1393 = vmul.f32 %v1392, %v1391
        %v1394 = vmul.f32 0.5, %v1393
        %v1395 = vsub.f32 1.5, %v1394
        %v1396 = vmul.f32 %v1391, %v1395
        %vm1397 = vweird.f32 %v1380
        %vm1398 = vweird.f32 %v1391
        %vm1399 = vmor %vm1397, %vm1398
        %v1400 = vsel %vm1399, %v1391, %v1396
        %v1401 = vmul.f32 %v1367, %v1390
        %v1402 = vmul.f32 %v1368, %v1400
        %v1403 = vperm.slane %v1121, 4
        %v1404 = vmul.f32 %v1401, %v1403
        %v1405 = vmul.f32 %v1402, %v1403
        %v1406 = vperm.slane %v1121, 5
        %v1407 = vadd.f32 %v1404, %v1406
        %v1408 = vadd.f32 %v1405, %v1406
        %s1409 = scalar_lea.vmem %s659, 4
        %v1410 = vld [vmem:[%s1409] sm:$0xf]
        %v1411 = vperm.slane %v1121, 2
        %v1413 = vsel %vm703, %v1407, 0
        %v1416 = vsel %vm703, %v1408, 0
        %v1419 = vsel %vm710, %v1410, 0
        %1421 = vmatpush.msra.mxu0 0.0
        %1422 = vmatpush.msra.mxu0 0.0
        %1423 = vmatpush.msra.mxu0 0.0
        %1424 = vmatpush.msra.mxu0 0.0
        %1425 = vmatpush.msra.mxu0 0.0
        %1426 = vmatpush.msra.mxu0 0.0
        %1427 = vmatpush.msra.mxu0 0.0
        %1428 = vmatpush.msra.mxu0 0.0
        %1429 = vmatpush.msra.mxu0 0.0
        %1430 = vmatpush.msra.mxu0 0.0
        %1431 = vmatpush.msra.mxu0 0.0
        %1432 = vmatpush.msra.mxu0 0.0
        %1433 = vmatpush.msra.mxu0 0.0
        %1434 = vmatpush.msra.mxu0 0.0
        %1435 = vmatpush.msra.mxu0 0.0
        %1436 = vmatpush.msra.mxu0 %v1419
        %1437 = vmatmul.f32.gmra.mxu0 %v1413
        %v1438 = vpop.f32.mrf.mxu0
        %v1439 = vadd.f32 %v1411, %v1438
        %1440 = vmatmul.f32.gmra.mxu0 %v1416
        %v1441 = vpop.f32.mrf.mxu0
        %v1442 = vadd.f32 %v1411, %v1441
        %1443 = vdwg.mxu0
        %v1444 = vmax.f32 %v1439, 0.0
        %v1445 = vmax.f32 %v1442, 0.0
        %s1446 = scalar_lea.vmem %s664, 8
        %v1447 = vld [vmem:[%s1446] sm:$0xff]
        %v1448 = vperm.slane %v1121, 3
        %v1450 = vsel %vm764, %v1444, 0
        %v1453 = vsel %vm764, %v1445, 0
        %1455 = vmatpush.msra.mxu0 0.0
        %1456 = vmatpush.msra.mxu0 0.0
        %1457 = vmatpush.msra.mxu0 0.0
        %1458 = vmatpush.msra.mxu0 0.0
        %1459 = vmatpush.msra.mxu0 0.0
        %1460 = vmatpush.msra.mxu0 0.0
        %1461 = vmatpush.msra.mxu0 0.0
        %1462 = vmatpush.msra.mxu0 0.0
        %1463 = vmatpush.msra.mxu0 0.0
        %1464 = vmatpush.msra.mxu0 0.0
        %1465 = vmatpush.msra.mxu0 0.0
        %1466 = vmatpush.msra.mxu0 0.0
        %1467 = vmatpush.msra.mxu0 0.0
        %1468 = vmatpush.msra.mxu0 0.0
        %1469 = vmatpush.msra.mxu0 0.0
        %1470 = vmatpush.msra.mxu0 %v1447
        %1471 = vmatmul.f32.gmra.mxu0 %v1450
        %v1472 = vpop.f32.mrf.mxu0
        %v1473 = vadd.f32 %v1448, %v1472
        %1474 = vmatmul.f32.gmra.mxu0 %v1453
        %v1475 = vpop.f32.mrf.mxu0
        %v1476 = vadd.f32 %v1448, %v1475
        %1477 = vdwg.mxu0
        %v1478 = vadd.f32 %v1407, %v1473
        %v1479 = vadd.f32 %v1408, %v1476
        %v1480 = vsel %vm703, %v1478, 0.0
        %1481 = vadd.xlane.f32.xlu0 %v1480
        %v1482 = vpop.xlane.xlu0 %1481
        %v1483 = vsel %vm703, %v1479, 0.0
        %1484 = vadd.xlane.f32.xlu0 %v1483
        %v1485 = vpop.xlane.xlu0 %1484
        %v1486 = vmul.f32 %v1482, %v956
        %v1487 = vmul.f32 %v1485, %v956
        %v1488 = vsub.f32 %v1478, %v1486
        %v1489 = vsub.f32 %v1479, %v1487
        %v1490 = vmul.f32 %v1488, %v1488
        %v1491 = vmul.f32 %v1489, %v1489
        %v1492 = vsel %vm703, %v1490, 0.0
        %1493 = vadd.xlane.f32.xlu0 %v1492
        %v1494 = vpop.xlane.xlu0 %1493
        %v1495 = vsel %vm703, %v1491, 0.0
        %1496 = vadd.xlane.f32.xlu0 %v1495
        %v1497 = vpop.xlane.xlu0 %1496
        %v1498 = vmul.f32 %v1494, %v956
        %v1499 = vmul.f32 %v1497, %v956
        %v1500 = vadd.f32 %v1498, 1e-05
        %v1501 = vadd.f32 %v1499, 1e-05
        %v1502 = vrsqrt.pop %v1500
        %v1503 = vmul.f32 %v1502, %v1500
        %v1504 = vmul.f32 %v1503, %v1502
        %v1505 = vmul.f32 0.5, %v1504
        %v1506 = vsub.f32 1.5, %v1505
        %v1507 = vmul.f32 %v1502, %v1506
        %vm1508 = vweird.f32 %v1500
        %vm1509 = vweird.f32 %v1502
        %vm1510 = vmor %vm1508, %vm1509
        %v1511 = vsel %vm1510, %v1502, %v1507
        %v1512 = vrsqrt.pop %v1501
        %v1513 = vmul.f32 %v1512, %v1501
        %v1514 = vmul.f32 %v1513, %v1512
        %v1515 = vmul.f32 0.5, %v1514
        %v1516 = vsub.f32 1.5, %v1515
        %v1517 = vmul.f32 %v1512, %v1516
        %vm1518 = vweird.f32 %v1501
        %vm1519 = vweird.f32 %v1512
        %vm1520 = vmor %vm1518, %vm1519
        %v1521 = vsel %vm1520, %v1512, %v1517
        %v1522 = vmul.f32 %v1488, %v1511
        %v1523 = vmul.f32 %v1489, %v1521
        %v1524 = vperm.slane %v1121, 6
        %v1525 = vmul.f32 %v1522, %v1524
        %v1526 = vmul.f32 %v1523, %v1524
        %v1527 = vperm.slane %v1121, 7
        %v1528 = vadd.f32 %v1525, %v1527
        %v1529 = vadd.f32 %v1526, %v1527
        %1530 = vst.msk [vmem:[%s684] sm:$0xff] %vm703, %v1528
        %1531 = vst.msk [vmem:[%s684 + $0x8] sm:$0xff] %vm703, %v1529
        %v1533 = vrot.slane %v1528, 1
        %1534 = vrot.lane.b32.xlu0 %v1533, 4
        %v1535 = vpop.permute.xlu0 %1534
        %v1537 = vrot.slane %v1528, 2
        %1538 = vrot.lane.b32.xlu0 %v1537, 8
        %v1539 = vpop.permute.xlu0 %1538
        %v1541 = vrot.slane %v1528, 3
        %1542 = vrot.lane.b32.xlu0 %v1541, 12
        %v1543 = vpop.permute.xlu0 %1542
        %v1545 = vrot.slane %v1528, 4
        %1546 = vrot.lane.b32.xlu0 %v1545, 16
        %v1547 = vpop.permute.xlu0 %1546
        %v1549 = vrot.slane %v1528, 5
        %1550 = vrot.lane.b32.xlu0 %v1549, 20
        %v1551 = vpop.permute.xlu0 %1550
        %v1553 = vrot.slane %v1528, 6
        %1554 = vrot.lane.b32.xlu0 %v1553, 24
        %v1555 = vpop.permute.xlu0 %1554
        %v1557 = vrot.slane %v1528, 7
        %1558 = vrot.lane.b32.xlu0 %v1557, 28
        %v1559 = vpop.permute.xlu0 %1558
        %v1561 = vsel %vm703, %v1528, %v1535
        %v1562 = vsel %vm764, %v1561, %v1539
        %vm1563 = vcmask 97280
        %v1564 = vsel %vm1563, %v1562, %v1543
        %vm1565 = vcmask 130048
        %v1566 = vsel %vm1565, %v1564, %v1547
        %vm1567 = vcmask 162816
        %v1568 = vsel %vm1567, %v1566, %v1551
        %vm1569 = vcmask 195584
        %v1570 = vsel %vm1569, %v1568, %v1555
        %vm1571 = vcmask 228352
        %v1572 = vsel %vm1571, %v1570, %v1559
        %v1574 = vrot.slane %v1529, 1
        %1575 = vrot.lane.b32.xlu0 %v1574, 4
        %v1576 = vpop.permute.xlu0 %1575
        %v1578 = vrot.slane %v1529, 2
        %1579 = vrot.lane.b32.xlu0 %v1578, 8
        %v1580 = vpop.permute.xlu0 %1579
        %v1582 = vrot.slane %v1529, 3
        %1583 = vrot.lane.b32.xlu0 %v1582, 12
        %v1584 = vpop.permute.xlu0 %1583
        %v1586 = vrot.slane %v1529, 4
        %1587 = vrot.lane.b32.xlu0 %v1586, 16
        %v1588 = vpop.permute.xlu0 %1587
        %v1590 = vrot.slane %v1529, 5
        %1591 = vrot.lane.b32.xlu0 %v1590, 20
        %v1592 = vpop.permute.xlu0 %1591
        %v1594 = vrot.slane %v1529, 6
        %1595 = vrot.lane.b32.xlu0 %v1594, 24
        %v1596 = vpop.permute.xlu0 %1595
        %v1598 = vrot.slane %v1529, 7
        %1599 = vrot.lane.b32.xlu0 %v1598, 28
        %v1600 = vpop.permute.xlu0 %1599
        %v1602 = vsel %vm703, %v1529, %v1576
        %v1603 = vsel %vm764, %v1602, %v1580
        %v1604 = vsel %vm1563, %v1603, %v1584
        %v1605 = vsel %vm1565, %v1604, %v1588
        %v1606 = vsel %vm1567, %v1605, %v1592
        %v1607 = vsel %vm1569, %v1606, %v1596
        %v1608 = vsel %vm1571, %v1607, %v1600
        %v1610 = vrot.slane %v1608, 7
        %vm1612 = vcmask 1040384
        %v1613 = vsel %vm1612, %v1572, %v1610
        %v1614 = vld [vmem:[%s674] sm:$0x77]
        %v1615 = vld [vmem:[%s528] sm:$0xff]
        %v1616 = vld [vmem:[%s528 + $0x8] sm:$0xff]
        %v1617 = vld [vmem:[%s528 + $0x10] sm:$0xff]
        %v1618 = vld [vmem:[%s528 + $0x18] sm:$0xff]
        %v1619 = vld [vmem:[%s528 + $0x20] sm:$0xff]
        %v1620 = vld [vmem:[%s528 + $0x28] sm:$0xff]
        %v1621 = vld [vmem:[%s528 + $0x30] sm:$0xff]
        %v1622 = vld [vmem:[%s528 + $0x38] sm:$0xff]
        %v1624 = vperm.slane %v1614, 0
        %v1625 = vperm.slane %v1614, 4
        %v1628 = vperm.slane %v1624, 0
        %v1629 = vperm.slane %v1625, 0
        %vm1630 = vcmask 261120
        %v1632 = vsel %vm1630, %v1613, 0
        %1634 = vmatpush.msra.mxu0 0.0
        %1635 = vmatpush.msra.mxu0 0.0
        %1636 = vmatpush.msra.mxu0 0.0
        %1637 = vmatpush.msra.mxu0 0.0
        %1638 = vmatpush.msra.mxu0 0.0
        %1639 = vmatpush.msra.mxu0 0.0
        %1640 = vmatpush.msra.mxu0 0.0
        %1641 = vmatpush.msra.mxu0 0.0
        %1642 = vmatpush.msra.mxu0 0.0
        %1643 = vmatpush.msra.mxu0 0.0
        %1644 = vmatpush.msra.mxu0 0.0
        %1645 = vmatpush.msra.mxu0 0.0
        %1646 = vmatpush.msra.mxu0 %v1621
        %1647 = vmatpush.msra.mxu0 %v1619
        %1648 = vmatpush.msra.mxu0 %v1617
        %1649 = vmatpush.msra.mxu0 %v1615
        %1650 = vmatmul.f32.gmra.mxu0 %v1632
        %v1651 = vpop.f32.mrf.mxu0
        %v1652 = vadd.f32 %v1628, %v1651
        %1653 = vdwg.mxu0
        %1654 = vmatpush.msra.mxu0 0.0
        %1655 = vmatpush.msra.mxu0 0.0
        %1656 = vmatpush.msra.mxu0 0.0
        %1657 = vmatpush.msra.mxu0 0.0
        %1658 = vmatpush.msra.mxu0 0.0
        %1659 = vmatpush.msra.mxu0 0.0
        %1660 = vmatpush.msra.mxu0 0.0
        %1661 = vmatpush.msra.mxu0 0.0
        %1662 = vmatpush.msra.mxu0 0.0
        %1663 = vmatpush.msra.mxu0 0.0
        %1664 = vmatpush.msra.mxu0 0.0
        %1665 = vmatpush.msra.mxu0 0.0
        %1666 = vmatpush.msra.mxu0 %v1622
        %1667 = vmatpush.msra.mxu0 %v1620
        %1668 = vmatpush.msra.mxu0 %v1618
        %1669 = vmatpush.msra.mxu0 %v1616
        %1670 = vmatmul.f32.gmra.mxu0 %v1632
        %v1671 = vpop.f32.mrf.mxu0
        %v1672 = vadd.f32 %v1629, %v1671
        %1673 = vdwg.mxu0
        %v1674 = vmax.f32 %v1652, 0.0
        %v1675 = vmax.f32 %v1672, 0.0
        %v1676 = vld [vmem:[%s538] sm:$0xff]
        %v1677 = vld [vmem:[%s538 + $0x8] sm:$0xff]
        %v1678 = vld [vmem:[%s538 + $0x10] sm:$0xff]
        %v1679 = vld [vmem:[%s538 + $0x18] sm:$0xff]
        %v1680 = vld [vmem:[%s538 + $0x20] sm:$0xff]
        %v1681 = vld [vmem:[%s538 + $0x28] sm:$0xff]
        %v1682 = vld [vmem:[%s538 + $0x30] sm:$0xff]
        %v1683 = vld [vmem:[%s538 + $0x38] sm:$0xff]
        %v1684 = vld [vmem:[%s538 + $0x40] sm:$0xff]
        %v1685 = vld [vmem:[%s538 + $0x48] sm:$0xff]
        %v1686 = vld [vmem:[%s538 + $0x50] sm:$0xff]
        %v1687 = vld [vmem:[%s538 + $0x58] sm:$0xff]
        %v1688 = vld [vmem:[%s538 + $0x60] sm:$0xff]
        %v1689 = vld [vmem:[%s538 + $0x68] sm:$0xff]
        %v1690 = vld [vmem:[%s538 + $0x70] sm:$0xff]
        %v1691 = vld [vmem:[%s538 + $0x78] sm:$0xff]
        %v1692 = vld [vmem:[%s538 + $0x80] sm:$0xff]
        %v1693 = vld [vmem:[%s538 + $0x88] sm:$0xff]
        %v1694 = vld [vmem:[%s538 + $0x90] sm:$0xff]
        %v1695 = vld [vmem:[%s538 + $0x98] sm:$0xff]
        %v1696 = vld [vmem:[%s538 + $0xa0] sm:$0xff]
        %v1697 = vld [vmem:[%s538 + $0xa8] sm:$0xff]
        %v1698 = vld [vmem:[%s538 + $0xb0] sm:$0xff]
        %v1699 = vld [vmem:[%s538 + $0xb8] sm:$0xff]
        %v1700 = vld [vmem:[%s538 + $0xc0] sm:$0xff]
        %v1701 = vld [vmem:[%s538 + $0xc8] sm:$0xff]
        %v1702 = vld [vmem:[%s538 + $0xd0] sm:$0xff]
        %v1703 = vld [vmem:[%s538 + $0xd8] sm:$0xff]
        %v1704 = vld [vmem:[%s538 + $0xe0] sm:$0xff]
        %v1705 = vld [vmem:[%s538 + $0xe8] sm:$0xff]
        %v1706 = vld [vmem:[%s538 + $0xf0] sm:$0xff]
        %v1707 = vld [vmem:[%s538 + $0xf8] sm:$0xff]
        %v1708 = vperm.slane %v1614, 1
        %1709 = vmatpush.msra.mxu0 %v1691
        %1710 = vmatpush.msra.mxu0 %v1690
        %1711 = vmatpush.msra.mxu0 %v1689
        %1712 = vmatpush.msra.mxu0 %v1688
        %1713 = vmatpush.msra.mxu0 %v1687
        %1714 = vmatpush.msra.mxu0 %v1686
        %1715 = vmatpush.msra.mxu0 %v1685
        %1716 = vmatpush.msra.mxu0 %v1684
        %1717 = vmatpush.msra.mxu0 %v1683
        %1718 = vmatpush.msra.mxu0 %v1682
        %1719 = vmatpush.msra.mxu0 %v1681
        %1720 = vmatpush.msra.mxu0 %v1680
        %1721 = vmatpush.msra.mxu0 %v1679
        %1722 = vmatpush.msra.mxu0 %v1678
        %1723 = vmatpush.msra.mxu0 %v1677
        %1724 = vmatpush.msra.mxu0 %v1676
        %1725 = vmatmul.f32.gmra.mxu0 %v1674
        %v1726 = vpop.f32.mrf.mxu0
        %v1727 = vadd.f32 %v1708, %v1726
        %1728 = vdwg.mxu0
        %1729 = vmatpush.msra.mxu0 %v1707
        %1730 = vmatpush.msra.mxu0 %v1706
        %1731 = vmatpush.msra.mxu0 %v1705
        %1732 = vmatpush.msra.mxu0 %v1704
        %1733 = vmatpush.msra.mxu0 %v1703
        %1734 = vmatpush.msra.mxu0 %v1702
        %1735 = vmatpush.msra.mxu0 %v1701
        %1736 = vmatpush.msra.mxu0 %v1700
        %1737 = vmatpush.msra.mxu0 %v1699
        %1738 = vmatpush.msra.mxu0 %v1698
        %1739 = vmatpush.msra.mxu0 %v1697
        %1740 = vmatpush.msra.mxu0 %v1696
        %1741 = vmatpush.msra.mxu0 %v1695
        %1742 = vmatpush.msra.mxu0 %v1694
        %1743 = vmatpush.msra.mxu0 %v1693
        %1744 = vmatpush.msra.mxu0 %v1692
        %1745 = vmatmul.f32.gmra.mxu0 %v1675
        %v1746 = vpop.f32.mrf.mxu0
        %v1747 = vadd.f32 %v1727, %v1746
        %1748 = vdwg.mxu0
        %1749 = vst [vmem:[%s697] sm:$0x3] %v1747
        %v1750 = vld [vmem:[%s679] sm:$0xff]
        %v1751 = vld [vmem:[%s679 + $0x8] sm:$0xff]
        %v1752 = vld [vmem:[%s679 + $0x10] sm:$0xff]
        %v1753 = vld [vmem:[%s679 + $0x18] sm:$0xff]
        %v1754 = vperm.slane %v1614, 2
        %1755 = vmatpush.msra.mxu0 0.0
        %1756 = vmatpush.msra.mxu0 0.0
        %1757 = vmatpush.msra.mxu0 0.0
        %1758 = vmatpush.msra.mxu0 0.0
        %1759 = vmatpush.msra.mxu0 0.0
        %1760 = vmatpush.msra.mxu0 0.0
        %1761 = vmatpush.msra.mxu0 0.0
        %1762 = vmatpush.msra.mxu0 0.0
        %1763 = vmatpush.msra.mxu0 0.0
        %1764 = vmatpush.msra.mxu0 0.0
        %1765 = vmatpush.msra.mxu0 0.0
        %1766 = vmatpush.msra.mxu0 0.0
        %1767 = vmatpush.msra.mxu0 %v1753
        %1768 = vmatpush.msra.mxu0 %v1752
        %1769 = vmatpush.msra.mxu0 %v1751
        %1770 = vmatpush.msra.mxu0 %v1750
        %1771 = vmatmul.f32.gmra.mxu0 %v1632
        %v1772 = vpop.f32.mrf.mxu0
        %v1773 = vadd.f32 %v1754, %v1772
        %1774 = vdwg.mxu0
        %vm1775 = vcmask 25600
        %1776 = vst.msk [vmem:[%s693] sm:$0x3] %vm1775, %v1773
        %p1777 = scmp.lt.s32.totalorder %s31, 1
        %s1778 = scalar_select %p1777, %s31, 1
        %s1779 = smul.addr %s1778, 2
        %s1780 = smul.addr %s1779, 8
        %s1781 = scalar_lea.vmem %s10, %s1780
        %p1782 = scmp.lt.s32.totalorder %s31, 1
        %s1783 = scalar_select %p1782, %s31, 1
        %s1784 = smul.addr %s1783, 4
        %s1785 = smul.addr %s1784, 8
        %s1786 = scalar_lea.vmem %s11, %s1785
        %p1787 = scmp.lt.s32.totalorder %s31, 1
        %s1788 = scalar_select %p1787, %s31, 1
        %s1789 = smul.addr %s1788, 2
        %s1790 = scalar_lea.vmem %s12, %s1789
        %p1791 = scmp.lt.s32.totalorder %s31, 1
        %s1792 = scalar_select %p1791, %s31, 1
        %s1793 = smul.addr %s1792, 2
        %s1794 = scalar_lea.vmem %s13, %s1793
        // Predicated region
        $region69: #{tft_viz_forward.1} parent=59 // pred_check
          %p1795 = pneg %p309
        $region70: #{tft_viz_forward.1} parent=59 // pred_check_branch
          %1797 = sbr.rel (%p1795) target = $region72
        $region71: #{tft_viz_forward.1} parent=59 // pred_region
          _
        $region72: #{tft_viz_forward.1} parent=59 // pred_fallthru
          _
        // Predicated region
        $region73: #{tft_viz_forward.1} parent=59 // pred_check
          %p1798 = pneg %p335
        $region74: #{tft_viz_forward.1} parent=59 // pred_check_branch
          %1800 = sbr.rel (%p1798) target = $region76
        $region75: #{tft_viz_forward.1} parent=59 // pred_region
          _
        $region76: #{tft_viz_forward.1} parent=59 // pred_fallthru
          _
        // Predicated region
        $region77: #{tft_viz_forward.1} parent=59 // pred_check
          %p1801 = pneg %p361
        $region78: #{tft_viz_forward.1} parent=59 // pred_check_branch
          %1803 = sbr.rel (%p1801) target = $region80
        $region79: #{tft_viz_forward.1} parent=59 // pred_region
          _
        $region80: #{tft_viz_forward.1} parent=59 // pred_fallthru
          _
        // Predicated region
        $region81: #{tft_viz_forward.1} parent=59 // pred_check
          %p1804 = pneg %p387
        $region82: #{tft_viz_forward.1} parent=59 // pred_check_branch
          %1806 = sbr.rel (%p1804) target = $region84
        $region83: #{tft_viz_forward.1} parent=59 // pred_region
          _
        $region84: #{tft_viz_forward.1} parent=59 // pred_fallthru
          _
      $region60: #{tft_viz_forward.1} parent=5 // pred_fallthru
        _
      %p1807 = scmp.le.s32.totalorder 2, %s26
      // Predicated region
      $region85: #{tft_viz_forward.1} parent=5 // pred_check
        %p1808 = pneg %p1807
      $region86: #{tft_viz_forward.1} parent=5 // pred_check_branch
        %1810 = sbr.rel (%p1808) target = $region88
      $region87: #{tft_viz_forward.1} parent=5 // pred_region
        %s1811 = ssub.s32 %s26, 2
        // Predicated region
        $region89: #{tft_viz_forward.1} parent=87 // pred_check
          %p1812 = pneg %p315
        $region90: #{tft_viz_forward.1} parent=87 // pred_check_branch
          %1814 = sbr.rel (%p1812) target = $region92
        $region91: #{tft_viz_forward.1} parent=87 // pred_region
          %p1815 = scmp.lt.s32.totalorder %s32, 1
          %s1816 = scalar_select %p1815, %s32, 1
          %s1817 = smul.addr %s1816, 2
          %s1818 = smul.addr %s1817, 8
          %s1819 = scalar_lea.vmem %s10, %s1818
        $region92: #{tft_viz_forward.1} parent=87 // pred_fallthru
          _
        // Predicated region
        $region93: #{tft_viz_forward.1} parent=87 // pred_check
          %p1820 = pneg %p341
        $region94: #{tft_viz_forward.1} parent=87 // pred_check_branch
          %1822 = sbr.rel (%p1820) target = $region96
        $region95: #{tft_viz_forward.1} parent=87 // pred_region
          %p1823 = scmp.lt.s32.totalorder %s32, 1
          %s1824 = scalar_select %p1823, %s32, 1
          %s1825 = smul.addr %s1824, 4
          %s1826 = smul.addr %s1825, 8
          %s1827 = scalar_lea.vmem %s11, %s1826
        $region96: #{tft_viz_forward.1} parent=87 // pred_fallthru
          _
        // Predicated region
        $region97: #{tft_viz_forward.1} parent=87 // pred_check
          %p1828 = pneg %p367
        $region98: #{tft_viz_forward.1} parent=87 // pred_check_branch
          %1830 = sbr.rel (%p1828) target = $region100
        $region99: #{tft_viz_forward.1} parent=87 // pred_region
          %p1831 = scmp.lt.s32.totalorder %s32, 1
          %s1832 = scalar_select %p1831, %s32, 1
          %s1833 = smul.addr %s1832, 2
          %s1834 = scalar_lea.vmem %s12, %s1833
        $region100: #{tft_viz_forward.1} parent=87 // pred_fallthru
          _
        // Predicated region
        $region101: #{tft_viz_forward.1} parent=87 // pred_check
          %p1835 = pneg %p393
        $region102: #{tft_viz_forward.1} parent=87 // pred_check_branch
          %1837 = sbr.rel (%p1835) target = $region104
        $region103: #{tft_viz_forward.1} parent=87 // pred_region
          %p1838 = scmp.lt.s32.totalorder %s32, 1
          %s1839 = scalar_select %p1838, %s32, 1
          %s1840 = smul.addr %s1839, 2
          %s1841 = scalar_lea.vmem %s13, %s1840
        $region104: #{tft_viz_forward.1} parent=87 // pred_fallthru
          _
      $region88: #{tft_viz_forward.1} parent=5 // pred_fallthru
        _
    $region6: #{tft_viz_forward.1} parent=1 // loop_footer
      %s30 = sadd.s32 1, %s26
    $region7: #{tft_viz_forward.1} parent=1 // loop_footer_branch
      %25 = sbr.rel target = $region3
    $region8: #{tft_viz_forward.1} parent=1 // loop_exit
      _
    %1842 = vsyncpa [#allocation3], 1
    %s1843 = scalar_lea.sflag [#allocation3], 1
    %1844 = vsyncpa %s1843, 1
    %1845 = vsyncpa [#allocation5], 1
    %s1846 = scalar_lea.sflag [#allocation5], 1
    %1847 = vsyncpa %s1846, 1

</llo_original>
